<compile_context>
chip_gen: v5e
topology: v5e:2x2
jax: 0.10.0
libtpu: 0.0.40
codegen_flags: <defaults>
</compile_context>

<pallas_src>
import functools

import jax
import jax.numpy as jnp
from jax.experimental import pallas as pl
from jax.experimental.pallas import tpu as pltpu


# ------------------------- Model config -------------------------

VOCAB = 100
MAX_POS = 16
TYPE_VOCAB = 2
HIDDEN = 32
NUM_HEADS = 2
HEAD_DIM = HIDDEN // NUM_HEADS
INTERMEDIATE = 64
NUM_LAYERS = 2
NUM_LABELS = 4
LANE = 128  # lane width used to pad small-parameter slabs / the output


# ------------------------- Pallas kernel -------------------------

def _ln(x, g, b):
    mu = jnp.mean(x, axis=-1, keepdims=True)
    var = jnp.mean(jnp.square(x - mu), axis=-1, keepdims=True)
    return (x - mu) * jax.lax.rsqrt(var + 1e-12) * g + b


def _kobert_kernel(emb_ref, mask_ref, const_ref, wqkv_ref, wo_ref, w1_ref,
                   w2_ref, lslab_ref, pool_w_ref, cls_w_ref, out_ref, *,
                   batch, seq, num_heads, head_dim, intermediate, num_layers):
    """Whole model in one invocation.

    emb_ref   : (B*S, H)      token+pos+type embeddings (pre-LN)
    mask_ref  : (B*S, B*S)    block-diagonal + padding additive attention bias
    const_ref : (8, 128)      row 0 emb_ln_g | 1 emb_ln_b | 2 pool_b | 3 cls_b (+ -1e9 lane pad)
    lslab_ref : (L, 8, 128)   row 0 bqkv | 1 bo | 2 ln1_g | 3 ln1_b | 4 b1 | 5 b2 | 6 ln2_g | 7 ln2_b
    cls_w_ref : (H, 128)      classifier weights, zero-padded beyond NUM_LABELS
    out_ref   : (B, 128)      lane-dense probability slab
    """
    hidden = num_heads * head_dim
    bs = batch * seq
    scale = 1.0 / float(head_dim) ** 0.5

    const = const_ref[...]
    x = _ln(emb_ref[...], const[0:1, :hidden], const[1:2, :hidden])   # (BS, H)
    mask = mask_ref[...]                                              # (BS, BS)

    # --- encoder layers, fully unrolled (L is small; all weights VMEM-resident) ---
    for l in range(num_layers):
        wqkv = wqkv_ref[l]                                            # (H, 3H)
        wo = wo_ref[l]                                                # (H, H)
        small = lslab_ref[l]                                          # (8, 128)

        # fused QKV projection over the flattened batch*seq rows
        qkv = (jnp.dot(x, wqkv, preferred_element_type=jnp.float32)
               + small[0:1, :3 * hidden])                             # (BS, 3H)

        # multi-head self-attention; per-head output accumulated straight
        # through Wo's row slice (no lane concat, no explicit transpose).
        attn = jnp.zeros((bs, hidden), jnp.float32)
        for h in range(num_heads):
            q = qkv[:, h * head_dim:(h + 1) * head_dim]
            k = qkv[:, hidden + h * head_dim:hidden + (h + 1) * head_dim]
            v = qkv[:, 2 * hidden + h * head_dim:2 * hidden + (h + 1) * head_dim]
            s = jax.lax.dot_general(
                q, k, (((1,), (1,)), ((), ())),
                preferred_element_type=jnp.float32) * scale + mask    # (BS, BS)
            m = jnp.max(s, axis=-1, keepdims=True)
            e = jnp.exp(s - m)
            p = e * pl.reciprocal(jnp.sum(e, axis=-1, keepdims=True), approx=True)
            ctx_h = jnp.dot(p, v, preferred_element_type=jnp.float32)  # (BS, dh)
            attn = attn + jnp.dot(ctx_h, wo[h * head_dim:(h + 1) * head_dim, :],
                                  preferred_element_type=jnp.float32)

        attn = attn + small[1:2, :hidden]                              # bo
        h1 = _ln(attn + x, small[2:3, :hidden], small[3:4, :hidden])

        # feed-forward + residual + LN2
        # TODO(synk): HF/KoBERT BERT uses erf-gelu; tanh-approx kept for robust Mosaic lowering.
        ffn = jax.nn.gelu(
            jnp.dot(h1, w1_ref[l], preferred_element_type=jnp.float32)
            + small[4:5, :intermediate],
            approximate=True)
        ffn = (jnp.dot(ffn, w2_ref[l], preferred_element_type=jnp.float32)
               + small[5:6, :hidden])
        x = _ln(ffn + h1, small[6:7, :hidden], small[7:8, :hidden])

    # --- pooler: pick each sequence's CLS row with a one-hot matmul (MXU, no shuffles) ---
    row_ids = jax.lax.broadcasted_iota(jnp.int32, (batch, bs), 0)
    col_ids = jax.lax.broadcasted_iota(jnp.int32, (batch, bs), 1)
    sel = (col_ids == row_ids * seq).astype(jnp.float32)              # (B, BS)
    cls = jnp.dot(sel, x, preferred_element_type=jnp.float32)         # (B, H)

    pooled = jnp.tanh(
        jnp.dot(cls, pool_w_ref[...], preferred_element_type=jnp.float32)
        + const[2:3, :hidden])

    # dropout(p=0.1) is identity at inference.
    # classifier weights are lane-padded with zeros; const row 3 carries the bias
    # for the valid labels and -1e9 for the pad lanes, so pad probs underflow to 0
    # and the softmax over valid labels sums to exactly 1.
    logits = (jnp.dot(pooled, cls_w_ref[...], preferred_element_type=jnp.float32)
              + const[3:4, :])                                         # (B, 128)
    mx = jnp.max(logits, axis=-1, keepdims=True)
    ex = jnp.exp(logits - mx)
    out_ref[...] = ex / jnp.sum(ex, axis=-1, keepdims=True)           # exact divide


# ------------------------- Params -------------------------

def init_params(key):
    # Pretrained weights cannot be loaded; deterministic random init instead.
    def nrm(k, shape, scale=0.02):
        return scale * jax.random.normal(k, shape, dtype=jnp.float32)

    ks = iter(jax.random.split(key, 16))
    H, I, L, C = HIDDEN, INTERMEDIATE, NUM_LAYERS, NUM_LABELS

    # Packed constant slab (one DMA stream):
    # row 0 emb_ln_g | 1 emb_ln_b | 2 pool_b | 3 cls_b (lanes >= C carry -1e9)
    const_slab = jnp.zeros((8, LANE), jnp.float32)
    const_slab = const_slab.at[0, :H].set(1.0)
    const_slab = const_slab.at[3, C:].set(-1e9)

    # Packed per-layer small slab (one DMA stream):
    # row 0 bqkv | 1 bo | 2 ln1_g | 3 ln1_b | 4 b1 | 5 b2 | 6 ln2_g | 7 ln2_b
    layer_slab = jnp.zeros((L, 8, LANE), jnp.float32)
    layer_slab = layer_slab.at[:, 2, :H].set(1.0)
    layer_slab = layer_slab.at[:, 6, :H].set(1.0)

    cls_w = nrm(next(ks), (H, C))
    cls_w_pad = jnp.zeros((H, LANE), jnp.float32).at[:, :C].set(cls_w)

    return {
        "word_emb": nrm(next(ks), (VOCAB, H)),
        "pos_emb": nrm(next(ks), (MAX_POS, H)),
        "type_emb": nrm(next(ks), (TYPE_VOCAB, H)),
        "const_slab": const_slab,
        # per-layer matmul weights stacked on a leading layer axis; Q|K|V fused.
        "wqkv": nrm(next(ks), (L, H, 3 * H)),
        "wo": nrm(next(ks), (L, H, H)),
        "w1": nrm(next(ks), (L, H, I)),
        "w2": nrm(next(ks), (L, I, H)),
        "layer_slab": layer_slab,
        "pool_w": nrm(next(ks), (H, H)),
        "cls_w_pad": cls_w_pad,
    }


# ------------------------- Forward pass -------------------------

def kobert_emotion_classifier(params, input_ids, attention_mask):
    B, S = input_ids.shape
    H, I, L, C = HIDDEN, INTERMEDIATE, NUM_LAYERS, NUM_LABELS
    BS = B * S

    # --- embeddings (data-dependent gather stays in XLA glue) ---
    tok = params["word_emb"][input_ids]                    # (B, S, H)
    pos = params["pos_emb"][:S][None, :, :]                # (1, S, H)
    typ = params["type_emb"][0][None, None, :]             # token_type_ids == 0
    emb = (tok + pos + typ).astype(jnp.float32).reshape(BS, H)

    # --- block-diagonal + padding additive attention bias over flattened tokens ---
    key_valid = attention_mask.astype(jnp.float32)                  # (B, S)
    same_batch = jnp.eye(B, dtype=jnp.float32)                      # (B, B)
    allowed = same_batch[:, :, None] * key_valid[None, :, :]        # (B, B', S)
    allowed = jnp.broadcast_to(allowed[:, None, :, :], (B, S, B, S)).reshape(BS, BS)
    mask_bias = (1.0 - allowed) * -1e9                              # (BS, BS)

    kern = functools.partial(
        _kobert_kernel, batch=B, seq=S, num_heads=NUM_HEADS,
        head_dim=HEAD_DIM, intermediate=I, num_layers=L)

    full2 = lambda i: (0, 0)
    full3 = lambda i: (0, 0, 0)

    # Single grid step: all weights (<100 KB f32) are VMEM-resident for the whole
    # model.  At real KoBERT shapes re-introduce a layer grid axis (bf16 weights,
    # raised vmem_limit_bytes) and a batch axis for v7x megacore once B grows.
    probs_pad = pl.pallas_call(
        kern,
        out_shape=jax.ShapeDtypeStruct((B, LANE), jnp.float32),
        grid=(1,),
        in_specs=[
            pl.BlockSpec((BS, H), full2),           # embeddings (flattened)
            pl.BlockSpec((BS, BS), full2),          # attention bias
            pl.BlockSpec((8, LANE), full2),         # packed constant slab
            pl.BlockSpec((L, H, 3 * H), full3),     # fused Wqkv (all layers)
            pl.BlockSpec((L, H, H), full3),         # Wo
            pl.BlockSpec((L, H, I), full3),         # W1
            pl.BlockSpec((L, I, H), full3),         # W2
            pl.BlockSpec((L, 8, LANE), full3),      # packed per-layer small slab
            pl.BlockSpec((H, H), full2),            # pooler W
            pl.BlockSpec((H, LANE), full2),         # classifier W (lane-padded)
        ],
        out_specs=pl.BlockSpec((B, LANE), full2),   # lane-dense probability slab
        compiler_params=pltpu.CompilerParams(
            dimension_semantics=("arbitrary",)),
    )(emb, mask_bias, params["const_slab"], params["wqkv"], params["wo"],
      params["w1"], params["w2"], params["layer_slab"],
      params["pool_w"], params["cls_w_pad"])

    return probs_pad[:, :C]


# ------------------------- Main -------------------------

if __name__ == "__main__":
    key = jax.random.PRNGKey(0)
    k_par, k_ids, k_msk = jax.random.split(key, 3)

    params = init_params(k_par)

    B, S = 2, 8
    input_ids = jax.random.randint(k_ids, (B, S), 0, VOCAB, dtype=jnp.int32)
    # mask out the tail of the second sequence to exercise the attention mask
    attention_mask = jnp.array(
        [[1, 1, 1, 1, 1, 1, 1, 1],
         [1, 1, 1, 1, 1, 0, 0, 0]], dtype=jnp.int32)

    probs = kobert_emotion_classifier(params, input_ids, attention_mask)
    probs = jax.block_until_ready(probs)

    assert probs.shape == (B, NUM_LABELS)
    assert bool(jnp.all(jnp.isfinite(probs)))
    assert bool(jnp.allclose(jnp.sum(probs, axis=-1), 1.0, atol=1e-5))
    print("KERNEL_OK")
</pallas_src>

<mosaic_0001>
module attributes {stable_mosaic.version = 11 : i64} {
  func.func @_kobert_kernel(%arg0: i32, %arg1: memref<16x32xf32, #tpu.memory_space<vmem>>, %arg2: memref<16x16xf32, #tpu.memory_space<vmem>>, %arg3: memref<8x128xf32, #tpu.memory_space<vmem>>, %arg4: memref<2x32x96xf32, #tpu.memory_space<vmem>>, %arg5: memref<2x32x32xf32, #tpu.memory_space<vmem>>, %arg6: memref<2x32x64xf32, #tpu.memory_space<vmem>>, %arg7: memref<2x64x32xf32, #tpu.memory_space<vmem>>, %arg8: memref<2x8x128xf32, #tpu.memory_space<vmem>>, %arg9: memref<32x32xf32, #tpu.memory_space<vmem>>, %arg10: memref<32x128xf32, #tpu.memory_space<vmem>>, %arg11: memref<2x128xf32, #tpu.memory_space<vmem>>) attributes {dimension_semantics = [#tpu.dimension_semantics<arbitrary>], iteration_bounds = array<i64: 1>, scalar_prefetch = 0 : i64, scratch_operands = 0 : i64, tpu.core_type = #tpu.core_type<tc>, window_params = [{pipeline_mode = #tpu.pipeline_mode<synchronous>, transform_indices = @transform_0, window_bounds = array<i64: 16, 32>}, {pipeline_mode = #tpu.pipeline_mode<synchronous>, transform_indices = @transform_1, window_bounds = array<i64: 16, 16>}, {pipeline_mode = #tpu.pipeline_mode<synchronous>, transform_indices = @transform_2, window_bounds = array<i64: 8, 128>}, {pipeline_mode = #tpu.pipeline_mode<synchronous>, transform_indices = @transform_3, window_bounds = array<i64: 2, 32, 96>}, {pipeline_mode = #tpu.pipeline_mode<synchronous>, transform_indices = @transform_4, window_bounds = array<i64: 2, 32, 32>}, {pipeline_mode = #tpu.pipeline_mode<synchronous>, transform_indices = @transform_5, window_bounds = array<i64: 2, 32, 64>}, {pipeline_mode = #tpu.pipeline_mode<synchronous>, transform_indices = @transform_6, window_bounds = array<i64: 2, 64, 32>}, {pipeline_mode = #tpu.pipeline_mode<synchronous>, transform_indices = @transform_7, window_bounds = array<i64: 2, 8, 128>}, {pipeline_mode = #tpu.pipeline_mode<synchronous>, transform_indices = @transform_8, window_bounds = array<i64: 32, 32>}, {pipeline_mode = #tpu.pipeline_mode<synchronous>, transform_indices = @transform_9, window_bounds = array<i64: 32, 128>}, {pipeline_mode = #tpu.pipeline_mode<synchronous>, transform_indices = @transform_10, window_bounds = array<i64: 2, 128>}]} {
    %c0 = arith.constant 0 : index
    %c0_0 = arith.constant 0 : index
    %0 = vector.load %arg3[%c0, %c0_0] : memref<8x128xf32, #tpu.memory_space<vmem>>, vector<8x128xf32>
    %c0_1 = arith.constant 0 : index
    %c0_2 = arith.constant 0 : index
    %1 = vector.load %arg1[%c0_1, %c0_2] : memref<16x32xf32, #tpu.memory_space<vmem>>, vector<16x32xf32>
    %2 = vector.extract_strided_slice %0 {offsets = [0, 0], sizes = [1, 32], strides = [1, 1]} : vector<8x128xf32> to vector<1x32xf32>
    %3 = vector.extract_strided_slice %0 {offsets = [1, 0], sizes = [1, 32], strides = [1, 1]} : vector<8x128xf32> to vector<1x32xf32>
    %cst = arith.constant dense<0.000000e+00> : vector<16xf32>
    %4 = vector.multi_reduction <add>, %1, %cst [1] : vector<16x32xf32> to vector<16xf32>
    %5 = vector.shape_cast %4 : vector<16xf32> to vector<16x1xf32>
    %cst_3 = arith.constant 3.200000e+01 : f32
    %6 = vector.broadcast %cst_3 : f32 to vector<16x1xf32>
    %7 = arith.divf %5, %6 : vector<16x1xf32>
    %8 = vector.broadcast %7 : vector<16x1xf32> to vector<16x32xf32>
    %9 = arith.subf %1, %8 : vector<16x32xf32>
    %10 = arith.mulf %9, %9 : vector<16x32xf32>
    %cst_4 = arith.constant dense<0.000000e+00> : vector<16xf32>
    %11 = vector.multi_reduction <add>, %10, %cst_4 [1] : vector<16x32xf32> to vector<16xf32>
    %12 = vector.shape_cast %11 : vector<16xf32> to vector<16x1xf32>
    %cst_5 = arith.constant 3.200000e+01 : f32
    %13 = vector.broadcast %cst_5 : f32 to vector<16x1xf32>
    %14 = arith.divf %12, %13 : vector<16x1xf32>
    %15 = vector.broadcast %7 : vector<16x1xf32> to vector<16x32xf32>
    %16 = arith.subf %1, %15 : vector<16x32xf32>
    %cst_6 = arith.constant 9.99999996E-13 : f32
    %17 = vector.broadcast %cst_6 : f32 to vector<16x1xf32>
    %18 = arith.addf %14, %17 : vector<16x1xf32>
    %19 = math.rsqrt %18 : vector<16x1xf32>
    %20 = vector.broadcast %19 : vector<16x1xf32> to vector<16x32xf32>
    %21 = arith.mulf %16, %20 : vector<16x32xf32>
    %22 = vector.broadcast %2 : vector<1x32xf32> to vector<16x32xf32>
    %23 = arith.mulf %21, %22 : vector<16x32xf32>
    %24 = vector.broadcast %3 : vector<1x32xf32> to vector<16x32xf32>
    %25 = arith.addf %23, %24 : vector<16x32xf32>
    %c0_7 = arith.constant 0 : index
    %c0_8 = arith.constant 0 : index
    %26 = vector.load %arg2[%c0_7, %c0_8] : memref<16x16xf32, #tpu.memory_space<vmem>>, vector<16x16xf32>
    %c0_9 = arith.constant 0 : index
    %c0_10 = arith.constant 0 : index
    %c0_11 = arith.constant 0 : index
    %27 = vector.load %arg4[%c0_9, %c0_10, %c0_11] : memref<2x32x96xf32, #tpu.memory_space<vmem>>, vector<1x32x96xf32>
    %28 = vector.shape_cast %27 : vector<1x32x96xf32> to vector<32x96xf32>
    %c0_12 = arith.constant 0 : index
    %c0_13 = arith.constant 0 : index
    %c0_14 = arith.constant 0 : index
    %29 = vector.load %arg5[%c0_12, %c0_13, %c0_14] : memref<2x32x32xf32, #tpu.memory_space<vmem>>, vector<1x32x32xf32>
    %30 = vector.shape_cast %29 : vector<1x32x32xf32> to vector<32x32xf32>
    %c0_15 = arith.constant 0 : index
    %c0_16 = arith.constant 0 : index
    %c0_17 = arith.constant 0 : index
    %31 = vector.load %arg8[%c0_15, %c0_16, %c0_17] : memref<2x8x128xf32, #tpu.memory_space<vmem>>, vector<1x8x128xf32>
    %32 = vector.shape_cast %31 : vector<1x8x128xf32> to vector<8x128xf32>
    %cst_18 = arith.constant dense<0.000000e+00> : vector<16x96xf32>
    %33 = tpu.matmul %25, %28, %cst_18 {dimension_numbers = #tpu.dot_dimension_numbers<[1], [0], [0], [1], [0, 0, 1, 1], [], []>} : vector<16x32xf32>, vector<32x96xf32>, vector<16x96xf32> -> vector<16x96xf32>
    %34 = vector.extract_strided_slice %32 {offsets = [0, 0], sizes = [1, 96], strides = [1, 1]} : vector<8x128xf32> to vector<1x96xf32>
    %35 = vector.broadcast %34 : vector<1x96xf32> to vector<16x96xf32>
    %36 = arith.addf %33, %35 : vector<16x96xf32>
    %cst_19 = arith.constant 0.000000e+00 : f32
    %37 = vector.broadcast %cst_19 : f32 to vector<16x32xf32>
    %38 = vector.extract_strided_slice %36 {offsets = [0, 0], sizes = [16, 16], strides = [1, 1]} : vector<16x96xf32> to vector<16x16xf32>
    %39 = vector.extract_strided_slice %36 {offsets = [0, 32], sizes = [16, 16], strides = [1, 1]} : vector<16x96xf32> to vector<16x16xf32>
    %40 = vector.extract_strided_slice %36 {offsets = [0, 64], sizes = [16, 16], strides = [1, 1]} : vector<16x96xf32> to vector<16x16xf32>
    %cst_20 = arith.constant dense<0.000000e+00> : vector<16x16xf32>
    %41 = tpu.matmul %38, %39, %cst_20 {dimension_numbers = #tpu.dot_dimension_numbers<[1], [1], [0], [0], [0, 0, 1, 0], [], []>} : vector<16x16xf32>, vector<16x16xf32>, vector<16x16xf32> -> vector<16x16xf32>
    %cst_21 = arith.constant 2.500000e-01 : f32
    %42 = vector.broadcast %cst_21 : f32 to vector<16x16xf32>
    %43 = arith.mulf %41, %42 : vector<16x16xf32>
    %44 = arith.addf %43, %26 : vector<16x16xf32>
    %cst_22 = arith.constant dense<0xFF800000> : vector<16xf32>
    %45 = vector.multi_reduction <maximumf>, %44, %cst_22 [1] : vector<16x16xf32> to vector<16xf32>
    %46 = vector.shape_cast %45 : vector<16xf32> to vector<16x1xf32>
    %47 = vector.broadcast %46 : vector<16x1xf32> to vector<16x16xf32>
    %48 = arith.subf %44, %47 : vector<16x16xf32>
    %49 = math.exp %48 : vector<16x16xf32>
    %cst_23 = arith.constant dense<0.000000e+00> : vector<16xf32>
    %50 = vector.multi_reduction <add>, %49, %cst_23 [1] : vector<16x16xf32> to vector<16xf32>
    %51 = vector.shape_cast %50 : vector<16xf32> to vector<16x1xf32>
    %52 = tpu.reciprocal %51 {approx = true} : vector<16x1xf32> -> vector<16x1xf32>
    %53 = vector.broadcast %52 : vector<16x1xf32> to vector<16x16xf32>
    %54 = arith.mulf %49, %53 : vector<16x16xf32>
    %cst_24 = arith.constant dense<0.000000e+00> : vector<16x16xf32>
    %55 = tpu.matmul %54, %40, %cst_24 {dimension_numbers = #tpu.dot_dimension_numbers<[1], [0], [0], [1], [0, 0, 1, 1], [], []>} : vector<16x16xf32>, vector<16x16xf32>, vector<16x16xf32> -> vector<16x16xf32>
    %56 = vector.extract_strided_slice %30 {offsets = [0, 0], sizes = [16, 32], strides = [1, 1]} : vector<32x32xf32> to vector<16x32xf32>
    %cst_25 = arith.constant dense<0.000000e+00> : vector<16x32xf32>
    %57 = tpu.matmul %55, %56, %cst_25 {dimension_numbers = #tpu.dot_dimension_numbers<[1], [0], [0], [1], [0, 0, 1, 1], [], []>} : vector<16x16xf32>, vector<16x32xf32>, vector<16x32xf32> -> vector<16x32xf32>
    %58 = arith.addf %37, %57 : vector<16x32xf32>
    %59 = vector.extract_strided_slice %36 {offsets = [0, 16], sizes = [16, 16], strides = [1, 1]} : vector<16x96xf32> to vector<16x16xf32>
    %60 = vector.extract_strided_slice %36 {offsets = [0, 48], sizes = [16, 16], strides = [1, 1]} : vector<16x96xf32> to vector<16x16xf32>
    %61 = vector.extract_strided_slice %36 {offsets = [0, 80], sizes = [16, 16], strides = [1, 1]} : vector<16x96xf32> to vector<16x16xf32>
    %cst_26 = arith.constant dense<0.000000e+00> : vector<16x16xf32>
    %62 = tpu.matmul %59, %60, %cst_26 {dimension_numbers = #tpu.dot_dimension_numbers<[1], [1], [0], [0], [0, 0, 1, 0], [], []>} : vector<16x16xf32>, vector<16x16xf32>, vector<16x16xf32> -> vector<16x16xf32>
    %cst_27 = arith.constant 2.500000e-01 : f32
    %63 = vector.broadcast %cst_27 : f32 to vector<16x16xf32>
    %64 = arith.mulf %62, %63 : vector<16x16xf32>
    %65 = arith.addf %64, %26 : vector<16x16xf32>
    %cst_28 = arith.constant dense<0xFF800000> : vector<16xf32>
    %66 = vector.multi_reduction <maximumf>, %65, %cst_28 [1] : vector<16x16xf32> to vector<16xf32>
    %67 = vector.shape_cast %66 : vector<16xf32> to vector<16x1xf32>
    %68 = vector.broadcast %67 : vector<16x1xf32> to vector<16x16xf32>
    %69 = arith.subf %65, %68 : vector<16x16xf32>
    %70 = math.exp %69 : vector<16x16xf32>
    %cst_29 = arith.constant dense<0.000000e+00> : vector<16xf32>
    %71 = vector.multi_reduction <add>, %70, %cst_29 [1] : vector<16x16xf32> to vector<16xf32>
    %72 = vector.shape_cast %71 : vector<16xf32> to vector<16x1xf32>
    %73 = tpu.reciprocal %72 {approx = true} : vector<16x1xf32> -> vector<16x1xf32>
    %74 = vector.broadcast %73 : vector<16x1xf32> to vector<16x16xf32>
    %75 = arith.mulf %70, %74 : vector<16x16xf32>
    %cst_30 = arith.constant dense<0.000000e+00> : vector<16x16xf32>
    %76 = tpu.matmul %75, %61, %cst_30 {dimension_numbers = #tpu.dot_dimension_numbers<[1], [0], [0], [1], [0, 0, 1, 1], [], []>} : vector<16x16xf32>, vector<16x16xf32>, vector<16x16xf32> -> vector<16x16xf32>
    %77 = vector.extract_strided_slice %30 {offsets = [16, 0], sizes = [16, 32], strides = [1, 1]} : vector<32x32xf32> to vector<16x32xf32>
    %cst_31 = arith.constant dense<0.000000e+00> : vector<16x32xf32>
    %78 = tpu.matmul %76, %77, %cst_31 {dimension_numbers = #tpu.dot_dimension_numbers<[1], [0], [0], [1], [0, 0, 1, 1], [], []>} : vector<16x16xf32>, vector<16x32xf32>, vector<16x32xf32> -> vector<16x32xf32>
    %79 = arith.addf %58, %78 : vector<16x32xf32>
    %80 = vector.extract_strided_slice %32 {offsets = [1, 0], sizes = [1, 32], strides = [1, 1]} : vector<8x128xf32> to vector<1x32xf32>
    %81 = vector.broadcast %80 : vector<1x32xf32> to vector<16x32xf32>
    %82 = arith.addf %79, %81 : vector<16x32xf32>
    %83 = arith.addf %82, %25 : vector<16x32xf32>
    %84 = vector.extract_strided_slice %32 {offsets = [2, 0], sizes = [1, 32], strides = [1, 1]} : vector<8x128xf32> to vector<1x32xf32>
    %85 = vector.extract_strided_slice %32 {offsets = [3, 0], sizes = [1, 32], strides = [1, 1]} : vector<8x128xf32> to vector<1x32xf32>
    %cst_32 = arith.constant dense<0.000000e+00> : vector<16xf32>
    %86 = vector.multi_reduction <add>, %83, %cst_32 [1] : vector<16x32xf32> to vector<16xf32>
    %87 = vector.shape_cast %86 : vector<16xf32> to vector<16x1xf32>
    %cst_33 = arith.constant 3.200000e+01 : f32
    %88 = vector.broadcast %cst_33 : f32 to vector<16x1xf32>
    %89 = arith.divf %87, %88 : vector<16x1xf32>
    %90 = vector.broadcast %89 : vector<16x1xf32> to vector<16x32xf32>
    %91 = arith.subf %83, %90 : vector<16x32xf32>
    %92 = arith.mulf %91, %91 : vector<16x32xf32>
    %cst_34 = arith.constant dense<0.000000e+00> : vector<16xf32>
    %93 = vector.multi_reduction <add>, %92, %cst_34 [1] : vector<16x32xf32> to vector<16xf32>
    %94 = vector.shape_cast %93 : vector<16xf32> to vector<16x1xf32>
    %cst_35 = arith.constant 3.200000e+01 : f32
    %95 = vector.broadcast %cst_35 : f32 to vector<16x1xf32>
    %96 = arith.divf %94, %95 : vector<16x1xf32>
    %97 = vector.broadcast %89 : vector<16x1xf32> to vector<16x32xf32>
    %98 = arith.subf %83, %97 : vector<16x32xf32>
    %cst_36 = arith.constant 9.99999996E-13 : f32
    %99 = vector.broadcast %cst_36 : f32 to vector<16x1xf32>
    %100 = arith.addf %96, %99 : vector<16x1xf32>
    %101 = math.rsqrt %100 : vector<16x1xf32>
    %102 = vector.broadcast %101 : vector<16x1xf32> to vector<16x32xf32>
    %103 = arith.mulf %98, %102 : vector<16x32xf32>
    %104 = vector.broadcast %84 : vector<1x32xf32> to vector<16x32xf32>
    %105 = arith.mulf %103, %104 : vector<16x32xf32>
    %106 = vector.broadcast %85 : vector<1x32xf32> to vector<16x32xf32>
    %107 = arith.addf %105, %106 : vector<16x32xf32>
    %c0_37 = arith.constant 0 : index
    %c0_38 = arith.constant 0 : index
    %c0_39 = arith.constant 0 : index
    %108 = vector.load %arg6[%c0_37, %c0_38, %c0_39] : memref<2x32x64xf32, #tpu.memory_space<vmem>>, vector<1x32x64xf32>
    %109 = vector.shape_cast %108 : vector<1x32x64xf32> to vector<32x64xf32>
    %cst_40 = arith.constant dense<0.000000e+00> : vector<16x64xf32>
    %110 = tpu.matmul %107, %109, %cst_40 {dimension_numbers = #tpu.dot_dimension_numbers<[1], [0], [0], [1], [0, 0, 1, 1], [], []>} : vector<16x32xf32>, vector<32x64xf32>, vector<16x64xf32> -> vector<16x64xf32>
    %111 = vector.extract_strided_slice %32 {offsets = [4, 0], sizes = [1, 64], strides = [1, 1]} : vector<8x128xf32> to vector<1x64xf32>
    %112 = vector.broadcast %111 : vector<1x64xf32> to vector<16x64xf32>
    %113 = arith.addf %110, %112 : vector<16x64xf32>
    %114 = arith.mulf %113, %113 : vector<16x64xf32>
    %115 = arith.mulf %113, %114 : vector<16x64xf32>
    %cst_41 = arith.constant 4.471500e-02 : f32
    %116 = vector.broadcast %cst_41 : f32 to vector<16x64xf32>
    %117 = arith.mulf %116, %115 : vector<16x64xf32>
    %118 = arith.addf %113, %117 : vector<16x64xf32>
    %cst_42 = arith.constant 0.797884583 : f32
    %119 = vector.broadcast %cst_42 : f32 to vector<16x64xf32>
    %120 = arith.mulf %119, %118 : vector<16x64xf32>
    %121 = math.tanh %120 : vector<16x64xf32>
    %cst_43 = arith.constant 1.000000e+00 : f32
    %122 = vector.broadcast %cst_43 : f32 to vector<16x64xf32>
    %123 = arith.addf %122, %121 : vector<16x64xf32>
    %cst_44 = arith.constant 5.000000e-01 : f32
    %124 = vector.broadcast %cst_44 : f32 to vector<16x64xf32>
    %125 = arith.mulf %124, %123 : vector<16x64xf32>
    %126 = arith.mulf %113, %125 : vector<16x64xf32>
    %c0_45 = arith.constant 0 : index
    %c0_46 = arith.constant 0 : index
    %c0_47 = arith.constant 0 : index
    %127 = vector.load %arg7[%c0_45, %c0_46, %c0_47] : memref<2x64x32xf32, #tpu.memory_space<vmem>>, vector<1x64x32xf32>
    %128 = vector.shape_cast %127 : vector<1x64x32xf32> to vector<64x32xf32>
    %cst_48 = arith.constant dense<0.000000e+00> : vector<16x32xf32>
    %129 = tpu.matmul %126, %128, %cst_48 {dimension_numbers = #tpu.dot_dimension_numbers<[1], [0], [0], [1], [0, 0, 1, 1], [], []>} : vector<16x64xf32>, vector<64x32xf32>, vector<16x32xf32> -> vector<16x32xf32>
    %130 = vector.extract_strided_slice %32 {offsets = [5, 0], sizes = [1, 32], strides = [1, 1]} : vector<8x128xf32> to vector<1x32xf32>
    %131 = vector.broadcast %130 : vector<1x32xf32> to vector<16x32xf32>
    %132 = arith.addf %129, %131 : vector<16x32xf32>
    %133 = arith.addf %132, %107 : vector<16x32xf32>
    %134 = vector.extract_strided_slice %32 {offsets = [6, 0], sizes = [1, 32], strides = [1, 1]} : vector<8x128xf32> to vector<1x32xf32>
    %135 = vector.extract_strided_slice %32 {offsets = [7, 0], sizes = [1, 32], strides = [1, 1]} : vector<8x128xf32> to vector<1x32xf32>
    %cst_49 = arith.constant dense<0.000000e+00> : vector<16xf32>
    %136 = vector.multi_reduction <add>, %133, %cst_49 [1] : vector<16x32xf32> to vector<16xf32>
    %137 = vector.shape_cast %136 : vector<16xf32> to vector<16x1xf32>
    %cst_50 = arith.constant 3.200000e+01 : f32
    %138 = vector.broadcast %cst_50 : f32 to vector<16x1xf32>
    %139 = arith.divf %137, %138 : vector<16x1xf32>
    %140 = vector.broadcast %139 : vector<16x1xf32> to vector<16x32xf32>
    %141 = arith.subf %133, %140 : vector<16x32xf32>
    %142 = arith.mulf %141, %141 : vector<16x32xf32>
    %cst_51 = arith.constant dense<0.000000e+00> : vector<16xf32>
    %143 = vector.multi_reduction <add>, %142, %cst_51 [1] : vector<16x32xf32> to vector<16xf32>
    %144 = vector.shape_cast %143 : vector<16xf32> to vector<16x1xf32>
    %cst_52 = arith.constant 3.200000e+01 : f32
    %145 = vector.broadcast %cst_52 : f32 to vector<16x1xf32>
    %146 = arith.divf %144, %145 : vector<16x1xf32>
    %147 = vector.broadcast %139 : vector<16x1xf32> to vector<16x32xf32>
    %148 = arith.subf %133, %147 : vector<16x32xf32>
    %cst_53 = arith.constant 9.99999996E-13 : f32
    %149 = vector.broadcast %cst_53 : f32 to vector<16x1xf32>
    %150 = arith.addf %146, %149 : vector<16x1xf32>
    %151 = math.rsqrt %150 : vector<16x1xf32>
    %152 = vector.broadcast %151 : vector<16x1xf32> to vector<16x32xf32>
    %153 = arith.mulf %148, %152 : vector<16x32xf32>
    %154 = vector.broadcast %134 : vector<1x32xf32> to vector<16x32xf32>
    %155 = arith.mulf %153, %154 : vector<16x32xf32>
    %156 = vector.broadcast %135 : vector<1x32xf32> to vector<16x32xf32>
    %157 = arith.addf %155, %156 : vector<16x32xf32>
    %c1 = arith.constant 1 : index
    %c0_54 = arith.constant 0 : index
    %c0_55 = arith.constant 0 : index
    %158 = vector.load %arg4[%c1, %c0_54, %c0_55] : memref<2x32x96xf32, #tpu.memory_space<vmem>>, vector<1x32x96xf32>
    %159 = vector.shape_cast %158 : vector<1x32x96xf32> to vector<32x96xf32>
    %c1_56 = arith.constant 1 : index
    %c0_57 = arith.constant 0 : index
    %c0_58 = arith.constant 0 : index
    %160 = vector.load %arg5[%c1_56, %c0_57, %c0_58] : memref<2x32x32xf32, #tpu.memory_space<vmem>>, vector<1x32x32xf32>
    %161 = vector.shape_cast %160 : vector<1x32x32xf32> to vector<32x32xf32>
    %c1_59 = arith.constant 1 : index
    %c0_60 = arith.constant 0 : index
    %c0_61 = arith.constant 0 : index
    %162 = vector.load %arg8[%c1_59, %c0_60, %c0_61] : memref<2x8x128xf32, #tpu.memory_space<vmem>>, vector<1x8x128xf32>
    %163 = vector.shape_cast %162 : vector<1x8x128xf32> to vector<8x128xf32>
    %cst_62 = arith.constant dense<0.000000e+00> : vector<16x96xf32>
    %164 = tpu.matmul %157, %159, %cst_62 {dimension_numbers = #tpu.dot_dimension_numbers<[1], [0], [0], [1], [0, 0, 1, 1], [], []>} : vector<16x32xf32>, vector<32x96xf32>, vector<16x96xf32> -> vector<16x96xf32>
    %165 = vector.extract_strided_slice %163 {offsets = [0, 0], sizes = [1, 96], strides = [1, 1]} : vector<8x128xf32> to vector<1x96xf32>
    %166 = vector.broadcast %165 : vector<1x96xf32> to vector<16x96xf32>
    %167 = arith.addf %164, %166 : vector<16x96xf32>
    %cst_63 = arith.constant 0.000000e+00 : f32
    %168 = vector.broadcast %cst_63 : f32 to vector<16x32xf32>
    %169 = vector.extract_strided_slice %167 {offsets = [0, 0], sizes = [16, 16], strides = [1, 1]} : vector<16x96xf32> to vector<16x16xf32>
    %170 = vector.extract_strided_slice %167 {offsets = [0, 32], sizes = [16, 16], strides = [1, 1]} : vector<16x96xf32> to vector<16x16xf32>
    %171 = vector.extract_strided_slice %167 {offsets = [0, 64], sizes = [16, 16], strides = [1, 1]} : vector<16x96xf32> to vector<16x16xf32>
    %cst_64 = arith.constant dense<0.000000e+00> : vector<16x16xf32>
    %172 = tpu.matmul %169, %170, %cst_64 {dimension_numbers = #tpu.dot_dimension_numbers<[1], [1], [0], [0], [0, 0, 1, 0], [], []>} : vector<16x16xf32>, vector<16x16xf32>, vector<16x16xf32> -> vector<16x16xf32>
    %cst_65 = arith.constant 2.500000e-01 : f32
    %173 = vector.broadcast %cst_65 : f32 to vector<16x16xf32>
    %174 = arith.mulf %172, %173 : vector<16x16xf32>
    %175 = arith.addf %174, %26 : vector<16x16xf32>
    %cst_66 = arith.constant dense<0xFF800000> : vector<16xf32>
    %176 = vector.multi_reduction <maximumf>, %175, %cst_66 [1] : vector<16x16xf32> to vector<16xf32>
    %177 = vector.shape_cast %176 : vector<16xf32> to vector<16x1xf32>
    %178 = vector.broadcast %177 : vector<16x1xf32> to vector<16x16xf32>
    %179 = arith.subf %175, %178 : vector<16x16xf32>
    %180 = math.exp %179 : vector<16x16xf32>
    %cst_67 = arith.constant dense<0.000000e+00> : vector<16xf32>
    %181 = vector.multi_reduction <add>, %180, %cst_67 [1] : vector<16x16xf32> to vector<16xf32>
    %182 = vector.shape_cast %181 : vector<16xf32> to vector<16x1xf32>
    %183 = tpu.reciprocal %182 {approx = true} : vector<16x1xf32> -> vector<16x1xf32>
    %184 = vector.broadcast %183 : vector<16x1xf32> to vector<16x16xf32>
    %185 = arith.mulf %180, %184 : vector<16x16xf32>
    %cst_68 = arith.constant dense<0.000000e+00> : vector<16x16xf32>
    %186 = tpu.matmul %185, %171, %cst_68 {dimension_numbers = #tpu.dot_dimension_numbers<[1], [0], [0], [1], [0, 0, 1, 1], [], []>} : vector<16x16xf32>, vector<16x16xf32>, vector<16x16xf32> -> vector<16x16xf32>
    %187 = vector.extract_strided_slice %161 {offsets = [0, 0], sizes = [16, 32], strides = [1, 1]} : vector<32x32xf32> to vector<16x32xf32>
    %cst_69 = arith.constant dense<0.000000e+00> : vector<16x32xf32>
    %188 = tpu.matmul %186, %187, %cst_69 {dimension_numbers = #tpu.dot_dimension_numbers<[1], [0], [0], [1], [0, 0, 1, 1], [], []>} : vector<16x16xf32>, vector<16x32xf32>, vector<16x32xf32> -> vector<16x32xf32>
    %189 = arith.addf %168, %188 : vector<16x32xf32>
    %190 = vector.extract_strided_slice %167 {offsets = [0, 16], sizes = [16, 16], strides = [1, 1]} : vector<16x96xf32> to vector<16x16xf32>
    %191 = vector.extract_strided_slice %167 {offsets = [0, 48], sizes = [16, 16], strides = [1, 1]} : vector<16x96xf32> to vector<16x16xf32>
    %192 = vector.extract_strided_slice %167 {offsets = [0, 80], sizes = [16, 16], strides = [1, 1]} : vector<16x96xf32> to vector<16x16xf32>
    %cst_70 = arith.constant dense<0.000000e+00> : vector<16x16xf32>
    %193 = tpu.matmul %190, %191, %cst_70 {dimension_numbers = #tpu.dot_dimension_numbers<[1], [1], [0], [0], [0, 0, 1, 0], [], []>} : vector<16x16xf32>, vector<16x16xf32>, vector<16x16xf32> -> vector<16x16xf32>
    %cst_71 = arith.constant 2.500000e-01 : f32
    %194 = vector.broadcast %cst_71 : f32 to vector<16x16xf32>
    %195 = arith.mulf %193, %194 : vector<16x16xf32>
    %196 = arith.addf %195, %26 : vector<16x16xf32>
    %cst_72 = arith.constant dense<0xFF800000> : vector<16xf32>
    %197 = vector.multi_reduction <maximumf>, %196, %cst_72 [1] : vector<16x16xf32> to vector<16xf32>
    %198 = vector.shape_cast %197 : vector<16xf32> to vector<16x1xf32>
    %199 = vector.broadcast %198 : vector<16x1xf32> to vector<16x16xf32>
    %200 = arith.subf %196, %199 : vector<16x16xf32>
    %201 = math.exp %200 : vector<16x16xf32>
    %cst_73 = arith.constant dense<0.000000e+00> : vector<16xf32>
    %202 = vector.multi_reduction <add>, %201, %cst_73 [1] : vector<16x16xf32> to vector<16xf32>
    %203 = vector.shape_cast %202 : vector<16xf32> to vector<16x1xf32>
    %204 = tpu.reciprocal %203 {approx = true} : vector<16x1xf32> -> vector<16x1xf32>
    %205 = vector.broadcast %204 : vector<16x1xf32> to vector<16x16xf32>
    %206 = arith.mulf %201, %205 : vector<16x16xf32>
    %cst_74 = arith.constant dense<0.000000e+00> : vector<16x16xf32>
    %207 = tpu.matmul %206, %192, %cst_74 {dimension_numbers = #tpu.dot_dimension_numbers<[1], [0], [0], [1], [0, 0, 1, 1], [], []>} : vector<16x16xf32>, vector<16x16xf32>, vector<16x16xf32> -> vector<16x16xf32>
    %208 = vector.extract_strided_slice %161 {offsets = [16, 0], sizes = [16, 32], strides = [1, 1]} : vector<32x32xf32> to vector<16x32xf32>
    %cst_75 = arith.constant dense<0.000000e+00> : vector<16x32xf32>
    %209 = tpu.matmul %207, %208, %cst_75 {dimension_numbers = #tpu.dot_dimension_numbers<[1], [0], [0], [1], [0, 0, 1, 1], [], []>} : vector<16x16xf32>, vector<16x32xf32>, vector<16x32xf32> -> vector<16x32xf32>
    %210 = arith.addf %189, %209 : vector<16x32xf32>
    %211 = vector.extract_strided_slice %163 {offsets = [1, 0], sizes = [1, 32], strides = [1, 1]} : vector<8x128xf32> to vector<1x32xf32>
    %212 = vector.broadcast %211 : vector<1x32xf32> to vector<16x32xf32>
    %213 = arith.addf %210, %212 : vector<16x32xf32>
    %214 = arith.addf %213, %157 : vector<16x32xf32>
    %215 = vector.extract_strided_slice %163 {offsets = [2, 0], sizes = [1, 32], strides = [1, 1]} : vector<8x128xf32> to vector<1x32xf32>
    %216 = vector.extract_strided_slice %163 {offsets = [3, 0], sizes = [1, 32], strides = [1, 1]} : vector<8x128xf32> to vector<1x32xf32>
    %cst_76 = arith.constant dense<0.000000e+00> : vector<16xf32>
    %217 = vector.multi_reduction <add>, %214, %cst_76 [1] : vector<16x32xf32> to vector<16xf32>
    %218 = vector.shape_cast %217 : vector<16xf32> to vector<16x1xf32>
    %cst_77 = arith.constant 3.200000e+01 : f32
    %219 = vector.broadcast %cst_77 : f32 to vector<16x1xf32>
    %220 = arith.divf %218, %219 : vector<16x1xf32>
    %221 = vector.broadcast %220 : vector<16x1xf32> to vector<16x32xf32>
    %222 = arith.subf %214, %221 : vector<16x32xf32>
    %223 = arith.mulf %222, %222 : vector<16x32xf32>
    %cst_78 = arith.constant dense<0.000000e+00> : vector<16xf32>
    %224 = vector.multi_reduction <add>, %223, %cst_78 [1] : vector<16x32xf32> to vector<16xf32>
    %225 = vector.shape_cast %224 : vector<16xf32> to vector<16x1xf32>
    %cst_79 = arith.constant 3.200000e+01 : f32
    %226 = vector.broadcast %cst_79 : f32 to vector<16x1xf32>
    %227 = arith.divf %225, %226 : vector<16x1xf32>
    %228 = vector.broadcast %220 : vector<16x1xf32> to vector<16x32xf32>
    %229 = arith.subf %214, %228 : vector<16x32xf32>
    %cst_80 = arith.constant 9.99999996E-13 : f32
    %230 = vector.broadcast %cst_80 : f32 to vector<16x1xf32>
    %231 = arith.addf %227, %230 : vector<16x1xf32>
    %232 = math.rsqrt %231 : vector<16x1xf32>
    %233 = vector.broadcast %232 : vector<16x1xf32> to vector<16x32xf32>
    %234 = arith.mulf %229, %233 : vector<16x32xf32>
    %235 = vector.broadcast %215 : vector<1x32xf32> to vector<16x32xf32>
    %236 = arith.mulf %234, %235 : vector<16x32xf32>
    %237 = vector.broadcast %216 : vector<1x32xf32> to vector<16x32xf32>
    %238 = arith.addf %236, %237 : vector<16x32xf32>
    %c1_81 = arith.constant 1 : index
    %c0_82 = arith.constant 0 : index
    %c0_83 = arith.constant 0 : index
    %239 = vector.load %arg6[%c1_81, %c0_82, %c0_83] : memref<2x32x64xf32, #tpu.memory_space<vmem>>, vector<1x32x64xf32>
    %240 = vector.shape_cast %239 : vector<1x32x64xf32> to vector<32x64xf32>
    %cst_84 = arith.constant dense<0.000000e+00> : vector<16x64xf32>
    %241 = tpu.matmul %238, %240, %cst_84 {dimension_numbers = #tpu.dot_dimension_numbers<[1], [0], [0], [1], [0, 0, 1, 1], [], []>} : vector<16x32xf32>, vector<32x64xf32>, vector<16x64xf32> -> vector<16x64xf32>
    %242 = vector.extract_strided_slice %163 {offsets = [4, 0], sizes = [1, 64], strides = [1, 1]} : vector<8x128xf32> to vector<1x64xf32>
    %243 = vector.broadcast %242 : vector<1x64xf32> to vector<16x64xf32>
    %244 = arith.addf %241, %243 : vector<16x64xf32>
    %245 = arith.mulf %244, %244 : vector<16x64xf32>
    %246 = arith.mulf %244, %245 : vector<16x64xf32>
    %cst_85 = arith.constant 4.471500e-02 : f32
    %247 = vector.broadcast %cst_85 : f32 to vector<16x64xf32>
    %248 = arith.mulf %247, %246 : vector<16x64xf32>
    %249 = arith.addf %244, %248 : vector<16x64xf32>
    %cst_86 = arith.constant 0.797884583 : f32
    %250 = vector.broadcast %cst_86 : f32 to vector<16x64xf32>
    %251 = arith.mulf %250, %249 : vector<16x64xf32>
    %252 = math.tanh %251 : vector<16x64xf32>
    %cst_87 = arith.constant 1.000000e+00 : f32
    %253 = vector.broadcast %cst_87 : f32 to vector<16x64xf32>
    %254 = arith.addf %253, %252 : vector<16x64xf32>
    %cst_88 = arith.constant 5.000000e-01 : f32
    %255 = vector.broadcast %cst_88 : f32 to vector<16x64xf32>
    %256 = arith.mulf %255, %254 : vector<16x64xf32>
    %257 = arith.mulf %244, %256 : vector<16x64xf32>
    %c1_89 = arith.constant 1 : index
    %c0_90 = arith.constant 0 : index
    %c0_91 = arith.constant 0 : index
    %258 = vector.load %arg7[%c1_89, %c0_90, %c0_91] : memref<2x64x32xf32, #tpu.memory_space<vmem>>, vector<1x64x32xf32>
    %259 = vector.shape_cast %258 : vector<1x64x32xf32> to vector<64x32xf32>
    %cst_92 = arith.constant dense<0.000000e+00> : vector<16x32xf32>
    %260 = tpu.matmul %257, %259, %cst_92 {dimension_numbers = #tpu.dot_dimension_numbers<[1], [0], [0], [1], [0, 0, 1, 1], [], []>} : vector<16x64xf32>, vector<64x32xf32>, vector<16x32xf32> -> vector<16x32xf32>
    %261 = vector.extract_strided_slice %163 {offsets = [5, 0], sizes = [1, 32], strides = [1, 1]} : vector<8x128xf32> to vector<1x32xf32>
    %262 = vector.broadcast %261 : vector<1x32xf32> to vector<16x32xf32>
    %263 = arith.addf %260, %262 : vector<16x32xf32>
    %264 = arith.addf %263, %238 : vector<16x32xf32>
    %265 = vector.extract_strided_slice %163 {offsets = [6, 0], sizes = [1, 32], strides = [1, 1]} : vector<8x128xf32> to vector<1x32xf32>
    %266 = vector.extract_strided_slice %163 {offsets = [7, 0], sizes = [1, 32], strides = [1, 1]} : vector<8x128xf32> to vector<1x32xf32>
    %cst_93 = arith.constant dense<0.000000e+00> : vector<16xf32>
    %267 = vector.multi_reduction <add>, %264, %cst_93 [1] : vector<16x32xf32> to vector<16xf32>
    %268 = vector.shape_cast %267 : vector<16xf32> to vector<16x1xf32>
    %cst_94 = arith.constant 3.200000e+01 : f32
    %269 = vector.broadcast %cst_94 : f32 to vector<16x1xf32>
    %270 = arith.divf %268, %269 : vector<16x1xf32>
    %271 = vector.broadcast %270 : vector<16x1xf32> to vector<16x32xf32>
    %272 = arith.subf %264, %271 : vector<16x32xf32>
    %273 = arith.mulf %272, %272 : vector<16x32xf32>
    %cst_95 = arith.constant dense<0.000000e+00> : vector<16xf32>
    %274 = vector.multi_reduction <add>, %273, %cst_95 [1] : vector<16x32xf32> to vector<16xf32>
    %275 = vector.shape_cast %274 : vector<16xf32> to vector<16x1xf32>
    %cst_96 = arith.constant 3.200000e+01 : f32
    %276 = vector.broadcast %cst_96 : f32 to vector<16x1xf32>
    %277 = arith.divf %275, %276 : vector<16x1xf32>
    %278 = vector.broadcast %270 : vector<16x1xf32> to vector<16x32xf32>
    %279 = arith.subf %264, %278 : vector<16x32xf32>
    %cst_97 = arith.constant 9.99999996E-13 : f32
    %280 = vector.broadcast %cst_97 : f32 to vector<16x1xf32>
    %281 = arith.addf %277, %280 : vector<16x1xf32>
    %282 = math.rsqrt %281 : vector<16x1xf32>
    %283 = vector.broadcast %282 : vector<16x1xf32> to vector<16x32xf32>
    %284 = arith.mulf %279, %283 : vector<16x32xf32>
    %285 = vector.broadcast %265 : vector<1x32xf32> to vector<16x32xf32>
    %286 = arith.mulf %284, %285 : vector<16x32xf32>
    %287 = vector.broadcast %266 : vector<1x32xf32> to vector<16x32xf32>
    %288 = arith.addf %286, %287 : vector<16x32xf32>
    %289 = tpu.iota {dimensions = array<i32: 0>} : vector<2x16xi32>
    %290 = tpu.iota {dimensions = array<i32: 1>} : vector<2x16xi32>
    %c8_i32 = arith.constant 8 : i32
    %291 = vector.broadcast %c8_i32 : i32 to vector<2x16xi32>
    %292 = arith.muli %289, %291 : vector<2x16xi32>
    %293 = arith.cmpi eq, %290, %292 : vector<2x16xi32>
    %294 = arith.extui %293 : vector<2x16xi1> to vector<2x16xi32>
    %295 = arith.sitofp %294 : vector<2x16xi32> to vector<2x16xf32>
    %cst_98 = arith.constant dense<0.000000e+00> : vector<2x32xf32>
    %296 = tpu.matmul %295, %288, %cst_98 {dimension_numbers = #tpu.dot_dimension_numbers<[1], [0], [0], [1], [0, 0, 1, 1], [], []>} : vector<2x16xf32>, vector<16x32xf32>, vector<2x32xf32> -> vector<2x32xf32>
    %c0_99 = arith.constant 0 : index
    %c0_100 = arith.constant 0 : index
    %297 = vector.load %arg9[%c0_99, %c0_100] : memref<32x32xf32, #tpu.memory_space<vmem>>, vector<32x32xf32>
    %cst_101 = arith.constant dense<0.000000e+00> : vector<2x32xf32>
    %298 = tpu.matmul %296, %297, %cst_101 {dimension_numbers = #tpu.dot_dimension_numbers<[1], [0], [0], [1], [0, 0, 1, 1], [], []>} : vector<2x32xf32>, vector<32x32xf32>, vector<2x32xf32> -> vector<2x32xf32>
    %299 = vector.extract_strided_slice %0 {offsets = [2, 0], sizes = [1, 32], strides = [1, 1]} : vector<8x128xf32> to vector<1x32xf32>
    %300 = vector.broadcast %299 : vector<1x32xf32> to vector<2x32xf32>
    %301 = arith.addf %298, %300 : vector<2x32xf32>
    %302 = math.tanh %301 : vector<2x32xf32>
    %c0_102 = arith.constant 0 : index
    %c0_103 = arith.constant 0 : index
    %303 = vector.load %arg10[%c0_102, %c0_103] : memref<32x128xf32, #tpu.memory_space<vmem>>, vector<32x128xf32>
    %cst_104 = arith.constant dense<0.000000e+00> : vector<2x128xf32>
    %304 = tpu.matmul %302, %303, %cst_104 {dimension_numbers = #tpu.dot_dimension_numbers<[1], [0], [0], [1], [0, 0, 1, 1], [], []>} : vector<2x32xf32>, vector<32x128xf32>, vector<2x128xf32> -> vector<2x128xf32>
    %305 = vector.extract_strided_slice %0 {offsets = [3, 0], sizes = [1, 128], strides = [1, 1]} : vector<8x128xf32> to vector<1x128xf32>
    %306 = vector.broadcast %305 : vector<1x128xf32> to vector<2x128xf32>
    %307 = arith.addf %304, %306 : vector<2x128xf32>
    %cst_105 = arith.constant dense<0xFF800000> : vector<2xf32>
    %308 = vector.multi_reduction <maximumf>, %307, %cst_105 [1] : vector<2x128xf32> to vector<2xf32>
    %309 = vector.shape_cast %308 : vector<2xf32> to vector<2x1xf32>
    %310 = vector.broadcast %309 : vector<2x1xf32> to vector<2x128xf32>
    %311 = arith.subf %307, %310 : vector<2x128xf32>
    %312 = math.exp %311 : vector<2x128xf32>
    %cst_106 = arith.constant dense<0.000000e+00> : vector<2xf32>
    %313 = vector.multi_reduction <add>, %312, %cst_106 [1] : vector<2x128xf32> to vector<2xf32>
    %314 = vector.shape_cast %313 : vector<2xf32> to vector<2x1xf32>
    %315 = vector.broadcast %314 : vector<2x1xf32> to vector<2x128xf32>
    %316 = arith.divf %312, %315 : vector<2x128xf32>
    %c0_107 = arith.constant 0 : index
    %c0_108 = arith.constant 0 : index
    %317 = vector.load %arg11[%c0_107, %c0_108] : memref<2x128xf32, #tpu.memory_space<vmem>>, vector<2x128xf32>
    tpu.vector_store %arg11[%c0_107, %c0_108], %316 {strides = array<i32>} : memref<2x128xf32, #tpu.memory_space<vmem>>, vector<2x128xf32>,
    return
  }
  func.func @transform_0(%arg0: i32) -> (i32, i32) {
    %c0_i32 = arith.constant 0 : i32
    %c0_i32_0 = arith.constant 0 : i32
    %c0_i32_1 = arith.constant 0 : i32
    return %c0_i32, %c0_i32_0 : i32, i32
  }
  func.func @transform_1(%arg0: i32) -> (i32, i32) {
    %c0_i32 = arith.constant 0 : i32
    %c0_i32_0 = arith.constant 0 : i32
    %c0_i32_1 = arith.constant 0 : i32
    return %c0_i32, %c0_i32_0 : i32, i32
  }
  func.func @transform_2(%arg0: i32) -> (i32, i32) {
    %c0_i32 = arith.constant 0 : i32
    %c0_i32_0 = arith.constant 0 : i32
    %c0_i32_1 = arith.constant 0 : i32
    return %c0_i32, %c0_i32_0 : i32, i32
  }
  func.func @transform_3(%arg0: i32) -> (i32, i32, i32) {
    %c0_i32 = arith.constant 0 : i32
    %c0_i32_0 = arith.constant 0 : i32
    %c0_i32_1 = arith.constant 0 : i32
    %c0_i32_2 = arith.constant 0 : i32
    return %c0_i32, %c0_i32_0, %c0_i32_1 : i32, i32, i32
  }
  func.func @transform_4(%arg0: i32) -> (i32, i32, i32) {
    %c0_i32 = arith.constant 0 : i32
    %c0_i32_0 = arith.constant 0 : i32
    %c0_i32_1 = arith.constant 0 : i32
    %c0_i32_2 = arith.constant 0 : i32
    return %c0_i32, %c0_i32_0, %c0_i32_1 : i32, i32, i32
  }
  func.func @transform_5(%arg0: i32) -> (i32, i32, i32) {
    %c0_i32 = arith.constant 0 : i32
    %c0_i32_0 = arith.constant 0 : i32
    %c0_i32_1 = arith.constant 0 : i32
    %c0_i32_2 = arith.constant 0 : i32
    return %c0_i32, %c0_i32_0, %c0_i32_1 : i32, i32, i32
  }
  func.func @transform_6(%arg0: i32) -> (i32, i32, i32) {
    %c0_i32 = arith.constant 0 : i32
    %c0_i32_0 = arith.constant 0 : i32
    %c0_i32_1 = arith.constant 0 : i32
    %c0_i32_2 = arith.constant 0 : i32
    return %c0_i32, %c0_i32_0, %c0_i32_1 : i32, i32, i32
  }
  func.func @transform_7(%arg0: i32) -> (i32, i32, i32) {
    %c0_i32 = arith.constant 0 : i32
    %c0_i32_0 = arith.constant 0 : i32
    %c0_i32_1 = arith.constant 0 : i32
    %c0_i32_2 = arith.constant 0 : i32
    return %c0_i32, %c0_i32_0, %c0_i32_1 : i32, i32, i32
  }
  func.func @transform_8(%arg0: i32) -> (i32, i32) {
    %c0_i32 = arith.constant 0 : i32
    %c0_i32_0 = arith.constant 0 : i32
    %c0_i32_1 = arith.constant 0 : i32
    return %c0_i32, %c0_i32_0 : i32, i32
  }
  func.func @transform_9(%arg0: i32) -> (i32, i32) {
    %c0_i32 = arith.constant 0 : i32
    %c0_i32_0 = arith.constant 0 : i32
    %c0_i32_1 = arith.constant 0 : i32
    return %c0_i32, %c0_i32_0 : i32, i32
  }
  func.func @transform_10(%arg0: i32) -> (i32, i32) {
    %c0_i32 = arith.constant 0 : i32
    %c0_i32_0 = arith.constant 0 : i32
    %c0_i32_1 = arith.constant 0 : i32
    return %c0_i32, %c0_i32_0 : i32, i32
  }
}

</mosaic_0001>

<llo_original>
// kernel: tpu_custom_call.1
$region0: #{tpu_custom_call.1}
  #allocation0 [shape = 'u32[]', space=smem, size = 0x4, offset = 0x4, fixed_abs, tag = 'smem constant byte address 0x4 - core index']
  #allocation1 [shape = 'u32[72,128]{1,0:T(1,128)}', space=vmem, size = 0x9000, scoped, tag = 'internal scratch']
  %s0 = inlined_call_operand.hbm [shape: f32[16,32], index: 0, kind: input, shape index: {}]
  %s1 = inlined_call_operand.hbm [shape: f32[16,16], index: 1, kind: input, shape index: {}]
  %s2 = inlined_call_operand.hbm [shape: f32[8,128], index: 2, kind: input, shape index: {}]
  %s3 = inlined_call_operand.vmem [shape: f32[2,32,96], index: 3, kind: input, shape index: {}]
  %s4 = inlined_call_operand.vmem [shape: f32[2,32,32], index: 4, kind: input, shape index: {}]
  %s5 = inlined_call_operand.vmem [shape: f32[2,32,64], index: 5, kind: input, shape index: {}]
  %s6 = inlined_call_operand.vmem [shape: f32[2,64,32], index: 6, kind: input, shape index: {}]
  %s7 = inlined_call_operand.hbm [shape: f32[2,8,128], index: 7, kind: input, shape index: {}]
  %s8 = inlined_call_operand.hbm [shape: f32[32,32], index: 8, kind: input, shape index: {}]
  %s9 = inlined_call_operand.hbm [shape: f32[32,128], index: 9, kind: input, shape index: {}]
  %s10 = inlined_call_operand.hbm [shape: f32[2,128], index: 10, kind: output, shape index: {}]
  %s11 = sld [smem:[#allocation0]]
  $region74: #{tpu_custom_call.1} parent=0
    _
  %s13 = ssub.s32 1, %s11
  %s14 = scalar_select 0, %s13, %s11
  $region1: #{tpu_custom_call.1} parent=0
    #allocation2 [shape = 'u8[8192]{0}', space=vmem, size = 0x2000, scoped, tag = 'input window, operand 0, single buffered']
    #allocation3 [shape = 's32[1]{0}', space=sflag, size = 0x4, scoped, tag = 'scoped memory for tpu_custom_call.1']
    #allocation4 [shape = 's32[1]{0}', space=sflag, size = 0x4, scoped, tag = 'scoped memory for tpu_custom_call.1']
    #allocation5 [shape = 'u8[8192]{0}', space=vmem, size = 0x2000, scoped, tag = 'input window, operand 1, single buffered']
    #allocation6 [shape = 's32[1]{0}', space=sflag, size = 0x4, scoped, tag = 'scoped memory for tpu_custom_call.1']
    #allocation7 [shape = 'u8[4096]{0}', space=vmem, size = 0x1000, scoped, tag = 'input window, operand 2, single buffered']
    #allocation8 [shape = 'u8[8192]{0}', space=vmem, size = 0x2000, scoped, tag = 'input window, operand 7, single buffered']
    #allocation9 [shape = 's32[1]{0}', space=sflag, size = 0x4, scoped, tag = 'scoped memory for tpu_custom_call.1']
    #allocation10 [shape = 'u8[16384]{0}', space=vmem, size = 0x4000, scoped, tag = 'input window, operand 8, single buffered']
    #allocation11 [shape = 'u8[16384]{0}', space=vmem, size = 0x4000, scoped, tag = 'input window, operand 9, single buffered']
    #allocation12 [shape = 's32[1]{0}', space=sflag, size = 0x4, scoped, tag = 'scoped memory for tpu_custom_call.1']
    #allocation13 [shape = 'u8[1024]{0}', space=vmem, size = 0x400, scoped, tag = 'output window, operand 0, single buffered']
    %15 = vsyncpa [#allocation3], 0
    %16 = vsyncpa [#allocation6], 0
    %17 = vsyncpa [#allocation9], 0
    %18 = vsyncpa [#allocation12], 0
    %19 = vsyncpa [#allocation4], 0
    // Predicated region
    $region2: #{tpu_custom_call.1} parent=1 // pred_check
      _
    $region3: #{tpu_custom_call.1} parent=1 // pred_check_branch
      %21 = sbr.rel (0) target = $region5
    $region4: #{tpu_custom_call.1} parent=1 // pred_region
      %23 = vsyncadd [#allocation3], 0
      %s24 = sshll.u32 %s0, 4
      %s25 = int_to_ptr.hbm [resolvable:$true] %s24
      %s26 = sshll.u32 [#allocation2], 4
      %s27 = int_to_ptr.vmem [resolvable:$true] %s26
      %32 = dma.hbm_to_vmem [thread:$0]  %s25, 256, %s27, [#allocation3], 128, 128, 8
    $region5: #{tpu_custom_call.1} parent=1 // pred_fallthru
      _
    // Predicated region
    $region6: #{tpu_custom_call.1} parent=1 // pred_check
      _
    $region7: #{tpu_custom_call.1} parent=1 // pred_check_branch
      %34 = sbr.rel (0) target = $region9
    $region8: #{tpu_custom_call.1} parent=1 // pred_region
      %36 = vsyncadd [#allocation6], 0
      %s37 = sshll.u32 %s1, 4
      %s38 = int_to_ptr.hbm [resolvable:$true] %s37
      %s39 = sshll.u32 [#allocation5], 4
      %s40 = int_to_ptr.vmem [resolvable:$true] %s39
      %45 = dma.hbm_to_vmem [thread:$0]  %s38, 256, %s40, [#allocation6], 128, 128, 8
    $region9: #{tpu_custom_call.1} parent=1 // pred_fallthru
      _
    // Predicated region
    $region10: #{tpu_custom_call.1} parent=1 // pred_check
      _
    $region11: #{tpu_custom_call.1} parent=1 // pred_check_branch
      %47 = sbr.rel (0) target = $region13
    $region12: #{tpu_custom_call.1} parent=1 // pred_region
      %49 = vsyncadd [#allocation6], 0
      %s51 = sshll.u32 %s2, 4
      %s52 = int_to_ptr.hbm [resolvable:$true] %s51
      %s53 = sshll.u32 [#allocation7], 4
      %s54 = int_to_ptr.vmem [resolvable:$true] %s53
      %56 = dma.hbm_to_vmem [thread:$0]  %s52, 128, %s54, [#allocation6]
    $region13: #{tpu_custom_call.1} parent=1 // pred_fallthru
      _
    // Predicated region
    $region14: #{tpu_custom_call.1} parent=1 // pred_check
      _
    $region15: #{tpu_custom_call.1} parent=1 // pred_check_branch
      %58 = sbr.rel (0) target = $region17
    $region16: #{tpu_custom_call.1} parent=1 // pred_region
      _
    $region17: #{tpu_custom_call.1} parent=1 // pred_fallthru
      _
    // Predicated region
    $region18: #{tpu_custom_call.1} parent=1 // pred_check
      _
    $region19: #{tpu_custom_call.1} parent=1 // pred_check_branch
      %60 = sbr.rel (0) target = $region21
    $region20: #{tpu_custom_call.1} parent=1 // pred_region
      _
    $region21: #{tpu_custom_call.1} parent=1 // pred_fallthru
      _
    // Predicated region
    $region22: #{tpu_custom_call.1} parent=1 // pred_check
      _
    $region23: #{tpu_custom_call.1} parent=1 // pred_check_branch
      %62 = sbr.rel (0) target = $region25
    $region24: #{tpu_custom_call.1} parent=1 // pred_region
      _
    $region25: #{tpu_custom_call.1} parent=1 // pred_fallthru
      _
    // Predicated region
    $region26: #{tpu_custom_call.1} parent=1 // pred_check
      _
    $region27: #{tpu_custom_call.1} parent=1 // pred_check_branch
      %64 = sbr.rel (0) target = $region29
    $region28: #{tpu_custom_call.1} parent=1 // pred_region
      _
    $region29: #{tpu_custom_call.1} parent=1 // pred_fallthru
      _
    // Predicated region
    $region30: #{tpu_custom_call.1} parent=1 // pred_check
      _
    $region31: #{tpu_custom_call.1} parent=1 // pred_check_branch
      %66 = sbr.rel (0) target = $region33
    $region32: #{tpu_custom_call.1} parent=1 // pred_region
      %68 = vsyncadd [#allocation9], 0
      %s69 = sshll.u32 %s7, 4
      %s70 = int_to_ptr.hbm [resolvable:$true] %s69
      %s71 = sshll.u32 [#allocation8], 4
      %s72 = int_to_ptr.vmem [resolvable:$true] %s71
      %77 = dma.hbm_to_vmem [thread:$0]  %s70, 256, %s72, [#allocation9], 128, 128, 8
    $region33: #{tpu_custom_call.1} parent=1 // pred_fallthru
      _
    // Predicated region
    $region34: #{tpu_custom_call.1} parent=1 // pred_check
      _
    $region35: #{tpu_custom_call.1} parent=1 // pred_check_branch
      %79 = sbr.rel (0) target = $region37
    $region36: #{tpu_custom_call.1} parent=1 // pred_region
      %81 = vsyncadd [#allocation9], 0
      %s82 = sshll.u32 %s8, 4
      %s83 = int_to_ptr.hbm [resolvable:$true] %s82
      %s84 = sshll.u32 [#allocation10], 4
      %s85 = int_to_ptr.vmem [resolvable:$true] %s84
      %90 = dma.hbm_to_vmem [thread:$0]  %s83, 512, %s85, [#allocation9], 128, 128, 8
    $region37: #{tpu_custom_call.1} parent=1 // pred_fallthru
      _
    // Predicated region
    $region38: #{tpu_custom_call.1} parent=1 // pred_check
      _
    $region39: #{tpu_custom_call.1} parent=1 // pred_check_branch
      %92 = sbr.rel (0) target = $region41
    $region40: #{tpu_custom_call.1} parent=1 // pred_region
      %94 = vsyncadd [#allocation12], 0
      %s95 = sshll.u32 %s9, 4
      %s96 = int_to_ptr.hbm [resolvable:$true] %s95
      %s97 = sshll.u32 [#allocation11], 4
      %s98 = int_to_ptr.vmem [resolvable:$true] %s97
      %103 = dma.hbm_to_vmem [thread:$0]  %s96, 512, %s98, [#allocation12], 128, 128, 8
    $region41: #{tpu_custom_call.1} parent=1 // pred_fallthru
      _
    // Predicated region
    $region42: #{tpu_custom_call.1} parent=1 // pred_check
      _
    $region43: #{tpu_custom_call.1} parent=1 // pred_check_branch
      %105 = sbr.rel (0) target = $region45
    $region44: #{tpu_custom_call.1} parent=1 // pred_region
      %107 = dma.done [#allocation3], 256
    $region45: #{tpu_custom_call.1} parent=1 // pred_fallthru
      _
    // Predicated region
    $region46: #{tpu_custom_call.1} parent=1 // pred_check
      _
    $region47: #{tpu_custom_call.1} parent=1 // pred_check_branch
      %109 = sbr.rel (0) target = $region49
    $region48: #{tpu_custom_call.1} parent=1 // pred_region
      %111 = dma.done [#allocation6], 256
    $region49: #{tpu_custom_call.1} parent=1 // pred_fallthru
      _
    // Predicated region
    $region50: #{tpu_custom_call.1} parent=1 // pred_check
      _
    $region51: #{tpu_custom_call.1} parent=1 // pred_check_branch
      %113 = sbr.rel (0) target = $region53
    $region52: #{tpu_custom_call.1} parent=1 // pred_region
      %115 = dma.done [#allocation6], 128
    $region53: #{tpu_custom_call.1} parent=1 // pred_fallthru
      _
    // Predicated region
    $region54: #{tpu_custom_call.1} parent=1 // pred_check
      _
    $region55: #{tpu_custom_call.1} parent=1 // pred_check_branch
      %117 = sbr.rel (0) target = $region57
    $region56: #{tpu_custom_call.1} parent=1 // pred_region
      %119 = dma.done [#allocation9], 256
    $region57: #{tpu_custom_call.1} parent=1 // pred_fallthru
      _
    // Predicated region
    $region58: #{tpu_custom_call.1} parent=1 // pred_check
      _
    $region59: #{tpu_custom_call.1} parent=1 // pred_check_branch
      %121 = sbr.rel (0) target = $region61
    $region60: #{tpu_custom_call.1} parent=1 // pred_region
      %123 = dma.done [#allocation9], 512
    $region61: #{tpu_custom_call.1} parent=1 // pred_fallthru
      _
    // Predicated region
    $region62: #{tpu_custom_call.1} parent=1 // pred_check
      _
    $region63: #{tpu_custom_call.1} parent=1 // pred_check_branch
      %125 = sbr.rel (0) target = $region65
    $region64: #{tpu_custom_call.1} parent=1 // pred_region
      %127 = dma.done [#allocation12], 512
    $region65: #{tpu_custom_call.1} parent=1 // pred_fallthru
      _
    %v128 = vld [vmem:[#allocation7] sm:$0xff]
    %v129 = vld [vmem:[#allocation2] sm:$0xff]
    %v130 = vld [vmem:[#allocation2 + $0x8] sm:$0xff]
    %vm131 = vcmask 261120
    %v132 = vsel %vm131, %v129, 0.0
    %133 = vadd.xlane.f32.xlu0 %v132
    %v134 = vpop.xlane.xlu0 %133
    %v135 = vsel %vm131, %v130, 0.0
    %136 = vadd.xlane.f32.xlu0 %v135
    %v137 = vpop.xlane.xlu0 %136
    %v138 = vrcp.pop 32.0
    %v139 = vmul.f32 32.0, %v138
    %v140 = vsub.f32 1.0, %v139
    %v141 = vmul.f32 %v138, %v140
    %v142 = vadd.f32 %v138, %v141
    %vm143 = vweird.f32 %v138
    %v144 = vsel %vm143, %v138, %v142
    %v145 = vmul.f32 %v134, %v144
    %v146 = vmul.f32 %v137, %v144
    %v147 = vsub.f32 %v129, %v145
    %v148 = vsub.f32 %v130, %v146
    %v149 = vmul.f32 %v147, %v147
    %v150 = vmul.f32 %v148, %v148
    %v151 = vsel %vm131, %v149, 0.0
    %152 = vadd.xlane.f32.xlu0 %v151
    %v153 = vpop.xlane.xlu0 %152
    %v154 = vsel %vm131, %v150, 0.0
    %155 = vadd.xlane.f32.xlu0 %v154
    %v156 = vpop.xlane.xlu0 %155
    %v157 = vmul.f32 %v153, %v144
    %v158 = vmul.f32 %v156, %v144
    %v159 = vadd.f32 %v157, 1e-12
    %v160 = vadd.f32 %v158, 1e-12
    %v161 = vrsqrt.pop %v159
    %v162 = vmul.f32 %v161, %v159
    %v163 = vmul.f32 %v162, %v161
    %v164 = vmul.f32 0.5, %v163
    %v165 = vsub.f32 1.5, %v164
    %v166 = vmul.f32 %v161, %v165
    %vm167 = vweird.f32 %v159
    %vm168 = vweird.f32 %v161
    %vm169 = vmor %vm167, %vm168
    %v170 = vsel %vm169, %v161, %v166
    %v171 = vrsqrt.pop %v160
    %v172 = vmul.f32 %v171, %v160
    %v173 = vmul.f32 %v172, %v171
    %v174 = vmul.f32 0.5, %v173
    %v175 = vsub.f32 1.5, %v174
    %v176 = vmul.f32 %v171, %v175
    %vm177 = vweird.f32 %v160
    %vm178 = vweird.f32 %v171
    %vm179 = vmor %vm177, %vm178
    %v180 = vsel %vm179, %v171, %v176
    %v181 = vmul.f32 %v147, %v170
    %v182 = vmul.f32 %v148, %v180
    %v183 = vperm.slane %v128, 0
    %v184 = vmul.f32 %v181, %v183
    %v185 = vmul.f32 %v182, %v183
    %v186 = vperm.slane %v128, 1
    %v187 = vadd.f32 %v184, %v186
    %v188 = vadd.f32 %v185, %v186
    %v189 = vld [vmem:[#allocation5] sm:$0xff]
    %v190 = vld [vmem:[#allocation5 + $0x8] sm:$0xff]
    %v191 = vld [vmem:[%s3] sm:$0xff]
    %v192 = vld [vmem:[%s3 + $0x8] sm:$0xff]
    %v193 = vld [vmem:[%s3 + $0x10] sm:$0xff]
    %v194 = vld [vmem:[%s3 + $0x18] sm:$0xff]
    %v195 = vld [vmem:[%s4] sm:$0xff]
    %v196 = vld [vmem:[%s4 + $0x8] sm:$0xff]
    %v197 = vld [vmem:[%s4 + $0x10] sm:$0xff]
    %v198 = vld [vmem:[%s4 + $0x18] sm:$0xff]
    %v199 = vld [vmem:[#allocation8] sm:$0xff]
    %v200 = vperm.slane %v199, 0
    %v202 = vsel %vm131, %v187, 0
    %v205 = vsel %vm131, %v188, 0
    %207 = vmatpush.msra.mxu0 0.0
    %208 = vmatpush.msra.mxu0 0.0
    %209 = vmatpush.msra.mxu0 0.0
    %210 = vmatpush.msra.mxu0 0.0
    %211 = vmatpush.msra.mxu0 0.0
    %212 = vmatpush.msra.mxu0 0.0
    %213 = vmatpush.msra.mxu0 0.0
    %214 = vmatpush.msra.mxu0 0.0
    %215 = vmatpush.msra.mxu0 0.0
    %216 = vmatpush.msra.mxu0 0.0
    %217 = vmatpush.msra.mxu0 0.0
    %218 = vmatpush.msra.mxu0 0.0
    %219 = vmatpush.msra.mxu0 %v194
    %220 = vmatpush.msra.mxu0 %v193
    %221 = vmatpush.msra.mxu0 %v192
    %222 = vmatpush.msra.mxu0 %v191
    %223 = vmatmul.f32.gmra.mxu0 %v202
    %v224 = vpop.f32.mrf.mxu0
    %v225 = vadd.f32 %v200, %v224
    %226 = vmatmul.f32.gmra.mxu0 %v205
    %v227 = vpop.f32.mrf.mxu0
    %v228 = vadd.f32 %v200, %v227
    %229 = vdwg.mxu0
    %232 = vrot.lane.b32.xlu0 %v225, 96
    %v233 = vpop.permute.xlu0 %232
    %234 = vrot.lane.b32.xlu0 %v228, 96
    %v235 = vpop.permute.xlu0 %234
    %vm236 = vcmask 130048
    %v237 = vsel %vm236, %v225, 0
    %v239 = vsel %vm236, %v228, 0
    %v241 = vsel %vm236, %v233, 0
    %v243 = vsel %vm236, %v235, 0
    %245 = vmatpush.xpose.msra.mxu0 0.0
    %246 = vmatpush.xpose.msra.mxu0 0.0
    %247 = vmatpush.xpose.msra.mxu0 0.0
    %248 = vmatpush.xpose.msra.mxu0 0.0
    %249 = vmatpush.xpose.msra.mxu0 0.0
    %250 = vmatpush.xpose.msra.mxu0 0.0
    %251 = vmatpush.xpose.msra.mxu0 0.0
    %252 = vmatpush.xpose.msra.mxu0 0.0
    %253 = vmatpush.xpose.msra.mxu0 0.0
    %254 = vmatpush.xpose.msra.mxu0 0.0
    %255 = vmatpush.xpose.msra.mxu0 0.0
    %256 = vmatpush.xpose.msra.mxu0 0.0
    %257 = vmatpush.xpose.msra.mxu0 0.0
    %258 = vmatpush.xpose.msra.mxu0 0.0
    %259 = vmatpush.xpose.msra.mxu0 %v243
    %260 = vmatpush.xpose.msra.mxu0 %v241
    %261 = vmatmul.f32.gmra.mxu0 %v237
    %v262 = vpop.f32.mrf.mxu0
    %v263 = vadd.f32 0.0, %v262
    %264 = vmatmul.f32.gmra.mxu0 %v239
    %v265 = vpop.f32.mrf.mxu0
    %v266 = vadd.f32 0.0, %v265
    %267 = vdwg.mxu0
    %v268 = vmul.f32 %v263, 0.25
    %v269 = vmul.f32 %v266, 0.25
    %v270 = vadd.f32 %v268, %v189
    %v271 = vadd.f32 %v269, %v190
    %v272 = vsel %vm236, %v270, -inf
    %273 = vmax.xlane.f32.xlu0 %v272
    %v274 = vpop.xlane.xlu0 %273
    %v275 = vsel %vm236, %v271, -inf
    %276 = vmax.xlane.f32.xlu0 %v275
    %v277 = vpop.xlane.xlu0 %276
    %v278 = vsub.f32 %v270, %v274
    %v279 = vsub.f32 %v271, %v277
    %v280 = vmul.f32 %v278, 1.442695
    %v281 = vpow.pop %v280
    %v282 = vmul.f32 %v279, 1.442695
    %v283 = vpow.pop %v282
    %v284 = vsel %vm236, %v281, 0.0
    %285 = vadd.xlane.f32.xlu0 %v284
    %v286 = vpop.xlane.xlu0 %285
    %v287 = vsel %vm236, %v283, 0.0
    %288 = vadd.xlane.f32.xlu0 %v287
    %v289 = vpop.xlane.xlu0 %288
    %v290 = vrcp.pop %v286
    %v291 = vrcp.pop %v289
    %v292 = vmul.f32 %v281, %v290
    %v293 = vmul.f32 %v283, %v291
    %294 = vrot.lane.b32.xlu0 %v225, 64
    %v295 = vpop.permute.xlu0 %294
    %296 = vrot.lane.b32.xlu0 %v228, 64
    %v297 = vpop.permute.xlu0 %296
    %v301 = vsel %vm236, %v292, 0
    %v304 = vsel %vm236, %v293, 0
    %306 = vmatpush.msra.mxu0 0.0
    %307 = vmatpush.msra.mxu0 0.0
    %308 = vmatpush.msra.mxu0 0.0
    %309 = vmatpush.msra.mxu0 0.0
    %310 = vmatpush.msra.mxu0 0.0
    %311 = vmatpush.msra.mxu0 0.0
    %312 = vmatpush.msra.mxu0 0.0
    %313 = vmatpush.msra.mxu0 0.0
    %314 = vmatpush.msra.mxu0 0.0
    %315 = vmatpush.msra.mxu0 0.0
    %316 = vmatpush.msra.mxu0 0.0
    %317 = vmatpush.msra.mxu0 0.0
    %318 = vmatpush.msra.mxu0 0.0
    %319 = vmatpush.msra.mxu0 0.0
    %320 = vmatpush.msra.mxu0 %v297
    %321 = vmatpush.msra.mxu0 %v295
    %322 = vmatmul.f32.gmra.mxu0 %v301
    %v323 = vpop.f32.mrf.mxu0
    %v324 = vadd.f32 0.0, %v323
    %325 = vmatmul.f32.gmra.mxu0 %v304
    %v326 = vpop.f32.mrf.mxu0
    %v327 = vadd.f32 0.0, %v326
    %328 = vdwg.mxu0
    %329 = vrot.lane.b32.xlu0 %v225, 112
    %v330 = vpop.permute.xlu0 %329
    %331 = vrot.lane.b32.xlu0 %v228, 112
    %v332 = vpop.permute.xlu0 %331
    %333 = vrot.lane.b32.xlu0 %v225, 80
    %v334 = vpop.permute.xlu0 %333
    %335 = vrot.lane.b32.xlu0 %v228, 80
    %v336 = vpop.permute.xlu0 %335
    %v337 = vsel %vm236, %v330, 0
    %v339 = vsel %vm236, %v332, 0
    %v341 = vsel %vm236, %v334, 0
    %v343 = vsel %vm236, %v336, 0
    %345 = vmatpush.xpose.msra.mxu0 0.0
    %346 = vmatpush.xpose.msra.mxu0 0.0
    %347 = vmatpush.xpose.msra.mxu0 0.0
    %348 = vmatpush.xpose.msra.mxu0 0.0
    %349 = vmatpush.xpose.msra.mxu0 0.0
    %350 = vmatpush.xpose.msra.mxu0 0.0
    %351 = vmatpush.xpose.msra.mxu0 0.0
    %352 = vmatpush.xpose.msra.mxu0 0.0
    %353 = vmatpush.xpose.msra.mxu0 0.0
    %354 = vmatpush.xpose.msra.mxu0 0.0
    %355 = vmatpush.xpose.msra.mxu0 0.0
    %356 = vmatpush.xpose.msra.mxu0 0.0
    %357 = vmatpush.xpose.msra.mxu0 0.0
    %358 = vmatpush.xpose.msra.mxu0 0.0
    %359 = vmatpush.xpose.msra.mxu0 %v343
    %360 = vmatpush.xpose.msra.mxu0 %v341
    %361 = vmatmul.f32.gmra.mxu0 %v337
    %v362 = vpop.f32.mrf.mxu0
    %v363 = vadd.f32 0.0, %v362
    %364 = vmatmul.f32.gmra.mxu0 %v339
    %v365 = vpop.f32.mrf.mxu0
    %v366 = vadd.f32 0.0, %v365
    %367 = vdwg.mxu0
    %v368 = vmul.f32 %v363, 0.25
    %v369 = vmul.f32 %v366, 0.25
    %v370 = vadd.f32 %v368, %v189
    %v371 = vadd.f32 %v369, %v190
    %v372 = vsel %vm236, %v370, -inf
    %373 = vmax.xlane.f32.xlu0 %v372
    %v374 = vpop.xlane.xlu0 %373
    %v375 = vsel %vm236, %v371, -inf
    %376 = vmax.xlane.f32.xlu0 %v375
    %v377 = vpop.xlane.xlu0 %376
    %v378 = vsub.f32 %v370, %v374
    %v379 = vsub.f32 %v371, %v377
    %v380 = vmul.f32 %v378, 1.442695
    %v381 = vpow.pop %v380
    %v382 = vmul.f32 %v379, 1.442695
    %v383 = vpow.pop %v382
    %v384 = vsel %vm236, %v381, 0.0
    %385 = vadd.xlane.f32.xlu0 %v384
    %v386 = vpop.xlane.xlu0 %385
    %v387 = vsel %vm236, %v383, 0.0
    %388 = vadd.xlane.f32.xlu0 %v387
    %v389 = vpop.xlane.xlu0 %388
    %v390 = vrcp.pop %v386
    %v391 = vrcp.pop %v389
    %v392 = vmul.f32 %v381, %v390
    %v393 = vmul.f32 %v383, %v391
    %394 = vrot.lane.b32.xlu0 %v225, 48
    %v395 = vpop.permute.xlu0 %394
    %396 = vrot.lane.b32.xlu0 %v228, 48
    %v397 = vpop.permute.xlu0 %396
    %v401 = vsel %vm236, %v392, 0
    %v404 = vsel %vm236, %v393, 0
    %406 = vmatpush.msra.mxu0 0.0
    %407 = vmatpush.msra.mxu0 0.0
    %408 = vmatpush.msra.mxu0 0.0
    %409 = vmatpush.msra.mxu0 0.0
    %410 = vmatpush.msra.mxu0 0.0
    %411 = vmatpush.msra.mxu0 0.0
    %412 = vmatpush.msra.mxu0 0.0
    %413 = vmatpush.msra.mxu0 0.0
    %414 = vmatpush.msra.mxu0 0.0
    %415 = vmatpush.msra.mxu0 0.0
    %416 = vmatpush.msra.mxu0 0.0
    %417 = vmatpush.msra.mxu0 0.0
    %418 = vmatpush.msra.mxu0 0.0
    %419 = vmatpush.msra.mxu0 0.0
    %420 = vmatpush.msra.mxu0 %v397
    %421 = vmatpush.msra.mxu0 %v395
    %422 = vmatmul.f32.gmra.mxu0 %v401
    %v423 = vpop.f32.mrf.mxu0
    %v424 = vadd.f32 0.0, %v423
    %425 = vmatmul.f32.gmra.mxu0 %v404
    %v426 = vpop.f32.mrf.mxu0
    %v427 = vadd.f32 0.0, %v426
    %428 = vdwg.mxu0
    %v430 = vsel %vm236, %v424, 0
    %v433 = vsel %vm236, %v427, 0
    %435 = vmatpush.msra.mxu0 0.0
    %436 = vmatpush.msra.mxu0 0.0
    %437 = vmatpush.msra.mxu0 0.0
    %438 = vmatpush.msra.mxu0 0.0
    %439 = vmatpush.msra.mxu0 0.0
    %440 = vmatpush.msra.mxu0 0.0
    %441 = vmatpush.msra.mxu0 0.0
    %442 = vmatpush.msra.mxu0 0.0
    %443 = vmatpush.msra.mxu0 0.0
    %444 = vmatpush.msra.mxu0 0.0
    %445 = vmatpush.msra.mxu0 0.0
    %446 = vmatpush.msra.mxu0 0.0
    %447 = vmatpush.msra.mxu0 0.0
    %448 = vmatpush.msra.mxu0 0.0
    %449 = vmatpush.msra.mxu0 %v198
    %450 = vmatpush.msra.mxu0 %v197
    %451 = vmatmul.f32.gmra.mxu0 %v430
    %v452 = vpop.f32.mrf.mxu0
    %v453 = vadd.f32 0.0, %v452
    %454 = vmatmul.f32.gmra.mxu0 %v433
    %v455 = vpop.f32.mrf.mxu0
    %v456 = vadd.f32 0.0, %v455
    %457 = vdwg.mxu0
    %v459 = vsel %vm236, %v324, 0
    %v462 = vsel %vm236, %v327, 0
    %464 = vmatpush.msra.mxu0 0.0
    %465 = vmatpush.msra.mxu0 0.0
    %466 = vmatpush.msra.mxu0 0.0
    %467 = vmatpush.msra.mxu0 0.0
    %468 = vmatpush.msra.mxu0 0.0
    %469 = vmatpush.msra.mxu0 0.0
    %470 = vmatpush.msra.mxu0 0.0
    %471 = vmatpush.msra.mxu0 0.0
    %472 = vmatpush.msra.mxu0 0.0
    %473 = vmatpush.msra.mxu0 0.0
    %474 = vmatpush.msra.mxu0 0.0
    %475 = vmatpush.msra.mxu0 0.0
    %476 = vmatpush.msra.mxu0 0.0
    %477 = vmatpush.msra.mxu0 0.0
    %478 = vmatpush.msra.mxu0 %v196
    %479 = vmatpush.msra.mxu0 %v195
    %480 = vmatmul.f32.gmra.mxu0 %v459
    %v481 = vpop.f32.mrf.mxu0
    %v482 = vadd.f32 %v453, %v481
    %483 = vmatmul.f32.gmra.mxu0 %v462
    %v484 = vpop.f32.mrf.mxu0
    %v485 = vadd.f32 %v456, %v484
    %486 = vdwg.mxu0
    %v487 = vperm.slane %v199, 1
    %v488 = vadd.f32 %v482, %v487
    %v489 = vadd.f32 %v485, %v487
    %v490 = vadd.f32 %v488, %v187
    %v491 = vadd.f32 %v489, %v188
    %v492 = vsel %vm131, %v490, 0.0
    %493 = vadd.xlane.f32.xlu0 %v492
    %v494 = vpop.xlane.xlu0 %493
    %v495 = vsel %vm131, %v491, 0.0
    %496 = vadd.xlane.f32.xlu0 %v495
    %v497 = vpop.xlane.xlu0 %496
    %v498 = vmul.f32 %v494, %v144
    %v499 = vmul.f32 %v497, %v144
    %v500 = vsub.f32 %v490, %v498
    %v501 = vsub.f32 %v491, %v499
    %v502 = vmul.f32 %v500, %v500
    %v503 = vmul.f32 %v501, %v501
    %v504 = vsel %vm131, %v502, 0.0
    %505 = vadd.xlane.f32.xlu0 %v504
    %v506 = vpop.xlane.xlu0 %505
    %v507 = vsel %vm131, %v503, 0.0
    %508 = vadd.xlane.f32.xlu0 %v507
    %v509 = vpop.xlane.xlu0 %508
    %v510 = vmul.f32 %v506, %v144
    %v511 = vmul.f32 %v509, %v144
    %v512 = vadd.f32 %v510, 1e-12
    %v513 = vadd.f32 %v511, 1e-12
    %v514 = vrsqrt.pop %v512
    %v515 = vmul.f32 %v514, %v512
    %v516 = vmul.f32 %v515, %v514
    %v517 = vmul.f32 0.5, %v516
    %v518 = vsub.f32 1.5, %v517
    %v519 = vmul.f32 %v514, %v518
    %vm520 = vweird.f32 %v512
    %vm521 = vweird.f32 %v514
    %vm522 = vmor %vm520, %vm521
    %v523 = vsel %vm522, %v514, %v519
    %v524 = vrsqrt.pop %v513
    %v525 = vmul.f32 %v524, %v513
    %v526 = vmul.f32 %v525, %v524
    %v527 = vmul.f32 0.5, %v526
    %v528 = vsub.f32 1.5, %v527
    %v529 = vmul.f32 %v524, %v528
    %vm530 = vweird.f32 %v513
    %vm531 = vweird.f32 %v524
    %vm532 = vmor %vm530, %vm531
    %v533 = vsel %vm532, %v524, %v529
    %v534 = vmul.f32 %v500, %v523
    %v535 = vmul.f32 %v501, %v533
    %v536 = vperm.slane %v199, 2
    %v537 = vmul.f32 %v534, %v536
    %v538 = vmul.f32 %v535, %v536
    %v539 = vperm.slane %v199, 3
    %v540 = vadd.f32 %v537, %v539
    %v541 = vadd.f32 %v538, %v539
    %v542 = vld [vmem:[%s5] sm:$0xff]
    %v543 = vld [vmem:[%s5 + $0x8] sm:$0xff]
    %v544 = vld [vmem:[%s5 + $0x10] sm:$0xff]
    %v545 = vld [vmem:[%s5 + $0x18] sm:$0xff]
    %v546 = vperm.slane %v199, 4
    %v548 = vsel %vm131, %v540, 0
    %v551 = vsel %vm131, %v541, 0
    %553 = vmatpush.msra.mxu0 0.0
    %554 = vmatpush.msra.mxu0 0.0
    %555 = vmatpush.msra.mxu0 0.0
    %556 = vmatpush.msra.mxu0 0.0
    %557 = vmatpush.msra.mxu0 0.0
    %558 = vmatpush.msra.mxu0 0.0
    %559 = vmatpush.msra.mxu0 0.0
    %560 = vmatpush.msra.mxu0 0.0
    %561 = vmatpush.msra.mxu0 0.0
    %562 = vmatpush.msra.mxu0 0.0
    %563 = vmatpush.msra.mxu0 0.0
    %564 = vmatpush.msra.mxu0 0.0
    %565 = vmatpush.msra.mxu0 %v545
    %566 = vmatpush.msra.mxu0 %v544
    %567 = vmatpush.msra.mxu0 %v543
    %568 = vmatpush.msra.mxu0 %v542
    %569 = vmatmul.f32.gmra.mxu0 %v548
    %v570 = vpop.f32.mrf.mxu0
    %v571 = vadd.f32 %v546, %v570
    %572 = vmatmul.f32.gmra.mxu0 %v551
    %v573 = vpop.f32.mrf.mxu0
    %v574 = vadd.f32 %v546, %v573
    %575 = vdwg.mxu0
    %v576 = vmul.f32 %v571, %v571
    %v577 = vmul.f32 %v574, %v574
    %v578 = vmul.f32 %v571, %v576
    %v579 = vmul.f32 %v574, %v577
    %v580 = vmul.f32 %v578, 0.044715
    %v581 = vmul.f32 %v579, 0.044715
    %v582 = vadd.f32 %v571, %v580
    %v583 = vadd.f32 %v574, %v581
    %v584 = vmul.f32 %v582, 0.7978846
    %v585 = vmul.f32 %v583, 0.7978846
    %v586 = vtanh.pop %v584
    %v587 = vtanh.pop %v585
    %v588 = vadd.f32 %v586, 1.0
    %v589 = vadd.f32 %v587, 1.0
    %v590 = vmul.f32 %v588, 0.5
    %v591 = vmul.f32 %v589, 0.5
    %v592 = vmul.f32 %v571, %v590
    %v593 = vmul.f32 %v574, %v591
    %v594 = vld [vmem:[%s6] sm:$0xff]
    %v595 = vld [vmem:[%s6 + $0x8] sm:$0xff]
    %v596 = vld [vmem:[%s6 + $0x10] sm:$0xff]
    %v597 = vld [vmem:[%s6 + $0x18] sm:$0xff]
    %v598 = vld [vmem:[%s6 + $0x20] sm:$0xff]
    %v599 = vld [vmem:[%s6 + $0x28] sm:$0xff]
    %v600 = vld [vmem:[%s6 + $0x30] sm:$0xff]
    %v601 = vld [vmem:[%s6 + $0x38] sm:$0xff]
    %v602 = vperm.slane %v199, 5
    %vm603 = vcmask 523264
    %v605 = vsel %vm603, %v592, 0
    %v608 = vsel %vm603, %v593, 0
    %610 = vmatpush.msra.mxu0 0.0
    %611 = vmatpush.msra.mxu0 0.0
    %612 = vmatpush.msra.mxu0 0.0
    %613 = vmatpush.msra.mxu0 0.0
    %614 = vmatpush.msra.mxu0 0.0
    %615 = vmatpush.msra.mxu0 0.0
    %616 = vmatpush.msra.mxu0 0.0
    %617 = vmatpush.msra.mxu0 0.0
    %618 = vmatpush.msra.mxu0 %v601
    %619 = vmatpush.msra.mxu0 %v600
    %620 = vmatpush.msra.mxu0 %v599
    %621 = vmatpush.msra.mxu0 %v598
    %622 = vmatpush.msra.mxu0 %v597
    %623 = vmatpush.msra.mxu0 %v596
    %624 = vmatpush.msra.mxu0 %v595
    %625 = vmatpush.msra.mxu0 %v594
    %626 = vmatmul.f32.gmra.mxu0 %v605
    %v627 = vpop.f32.mrf.mxu0
    %v628 = vadd.f32 %v602, %v627
    %629 = vmatmul.f32.gmra.mxu0 %v608
    %v630 = vpop.f32.mrf.mxu0
    %v631 = vadd.f32 %v602, %v630
    %632 = vdwg.mxu0
    %v633 = vadd.f32 %v628, %v540
    %v634 = vadd.f32 %v631, %v541
    %v635 = vsel %vm131, %v633, 0.0
    %636 = vadd.xlane.f32.xlu0 %v635
    %v637 = vpop.xlane.xlu0 %636
    %v638 = vsel %vm131, %v634, 0.0
    %639 = vadd.xlane.f32.xlu0 %v638
    %v640 = vpop.xlane.xlu0 %639
    %v641 = vmul.f32 %v637, %v144
    %v642 = vmul.f32 %v640, %v144
    %v643 = vsub.f32 %v633, %v641
    %v644 = vsub.f32 %v634, %v642
    %v645 = vmul.f32 %v643, %v643
    %v646 = vmul.f32 %v644, %v644
    %v647 = vsel %vm131, %v645, 0.0
    %648 = vadd.xlane.f32.xlu0 %v647
    %v649 = vpop.xlane.xlu0 %648
    %v650 = vsel %vm131, %v646, 0.0
    %651 = vadd.xlane.f32.xlu0 %v650
    %v652 = vpop.xlane.xlu0 %651
    %v653 = vmul.f32 %v649, %v144
    %v654 = vmul.f32 %v652, %v144
    %v655 = vadd.f32 %v653, 1e-12
    %v656 = vadd.f32 %v654, 1e-12
    %v657 = vrsqrt.pop %v655
    %v658 = vmul.f32 %v657, %v655
    %v659 = vmul.f32 %v658, %v657
    %v660 = vmul.f32 0.5, %v659
    %v661 = vsub.f32 1.5, %v660
    %v662 = vmul.f32 %v657, %v661
    %vm663 = vweird.f32 %v655
    %vm664 = vweird.f32 %v657
    %vm665 = vmor %vm663, %vm664
    %v666 = vsel %vm665, %v657, %v662
    %v667 = vrsqrt.pop %v656
    %v668 = vmul.f32 %v667, %v656
    %v669 = vmul.f32 %v668, %v667
    %v670 = vmul.f32 0.5, %v669
    %v671 = vsub.f32 1.5, %v670
    %v672 = vmul.f32 %v667, %v671
    %vm673 = vweird.f32 %v656
    %vm674 = vweird.f32 %v667
    %vm675 = vmor %vm673, %vm674
    %v676 = vsel %vm675, %v667, %v672
    %v677 = vmul.f32 %v643, %v666
    %v678 = vmul.f32 %v644, %v676
    %v679 = vperm.slane %v199, 6
    %v680 = vmul.f32 %v677, %v679
    %v681 = vmul.f32 %v678, %v679
    %v682 = vperm.slane %v199, 7
    %v683 = vadd.f32 %v680, %v682
    %v684 = vadd.f32 %v681, %v682
    %s685 = scalar_lea.vmem %s3, 32
    %v686 = vld [vmem:[%s685] sm:$0xff]
    %v687 = vld [vmem:[%s685 + $0x8] sm:$0xff]
    %v688 = vld [vmem:[%s685 + $0x10] sm:$0xff]
    %v689 = vld [vmem:[%s685 + $0x18] sm:$0xff]
    %s690 = scalar_lea.vmem %s4, 32
    %v691 = vld [vmem:[%s690] sm:$0xff]
    %v692 = vld [vmem:[%s690 + $0x8] sm:$0xff]
    %v693 = vld [vmem:[%s690 + $0x10] sm:$0xff]
    %v694 = vld [vmem:[%s690 + $0x18] sm:$0xff]
    %s695 = scalar_lea.vmem [#allocation8], 8
    %v696 = vld [vmem:[%s695] sm:$0xff]
    %v697 = vperm.slane %v696, 0
    %v699 = vsel %vm131, %v683, 0
    %v702 = vsel %vm131, %v684, 0
    %704 = vmatpush.msra.mxu0 0.0
    %705 = vmatpush.msra.mxu0 0.0
    %706 = vmatpush.msra.mxu0 0.0
    %707 = vmatpush.msra.mxu0 0.0
    %708 = vmatpush.msra.mxu0 0.0
    %709 = vmatpush.msra.mxu0 0.0
    %710 = vmatpush.msra.mxu0 0.0
    %711 = vmatpush.msra.mxu0 0.0
    %712 = vmatpush.msra.mxu0 0.0
    %713 = vmatpush.msra.mxu0 0.0
    %714 = vmatpush.msra.mxu0 0.0
    %715 = vmatpush.msra.mxu0 0.0
    %716 = vmatpush.msra.mxu0 %v689
    %717 = vmatpush.msra.mxu0 %v688
    %718 = vmatpush.msra.mxu0 %v687
    %719 = vmatpush.msra.mxu0 %v686
    %720 = vmatmul.f32.gmra.mxu0 %v699
    %v721 = vpop.f32.mrf.mxu0
    %v722 = vadd.f32 %v697, %v721
    %723 = vmatmul.f32.gmra.mxu0 %v702
    %v724 = vpop.f32.mrf.mxu0
    %v725 = vadd.f32 %v697, %v724
    %726 = vdwg.mxu0
    %729 = vrot.lane.b32.xlu0 %v722, 96
    %v730 = vpop.permute.xlu0 %729
    %731 = vrot.lane.b32.xlu0 %v725, 96
    %v732 = vpop.permute.xlu0 %731
    %v733 = vsel %vm236, %v722, 0
    %v735 = vsel %vm236, %v725, 0
    %v737 = vsel %vm236, %v730, 0
    %v739 = vsel %vm236, %v732, 0
    %741 = vmatpush.xpose.msra.mxu0 0.0
    %742 = vmatpush.xpose.msra.mxu0 0.0
    %743 = vmatpush.xpose.msra.mxu0 0.0
    %744 = vmatpush.xpose.msra.mxu0 0.0
    %745 = vmatpush.xpose.msra.mxu0 0.0
    %746 = vmatpush.xpose.msra.mxu0 0.0
    %747 = vmatpush.xpose.msra.mxu0 0.0
    %748 = vmatpush.xpose.msra.mxu0 0.0
    %749 = vmatpush.xpose.msra.mxu0 0.0
    %750 = vmatpush.xpose.msra.mxu0 0.0
    %751 = vmatpush.xpose.msra.mxu0 0.0
    %752 = vmatpush.xpose.msra.mxu0 0.0
    %753 = vmatpush.xpose.msra.mxu0 0.0
    %754 = vmatpush.xpose.msra.mxu0 0.0
    %755 = vmatpush.xpose.msra.mxu0 %v739
    %756 = vmatpush.xpose.msra.mxu0 %v737
    %757 = vmatmul.f32.gmra.mxu0 %v733
    %v758 = vpop.f32.mrf.mxu0
    %v759 = vadd.f32 0.0, %v758
    %760 = vmatmul.f32.gmra.mxu0 %v735
    %v761 = vpop.f32.mrf.mxu0
    %v762 = vadd.f32 0.0, %v761
    %763 = vdwg.mxu0
    %v764 = vmul.f32 %v759, 0.25
    %v765 = vmul.f32 %v762, 0.25
    %v766 = vadd.f32 %v764, %v189
    %v767 = vadd.f32 %v765, %v190
    %v768 = vsel %vm236, %v766, -inf
    %769 = vmax.xlane.f32.xlu0 %v768
    %v770 = vpop.xlane.xlu0 %769
    %v771 = vsel %vm236, %v767, -inf
    %772 = vmax.xlane.f32.xlu0 %v771
    %v773 = vpop.xlane.xlu0 %772
    %v774 = vsub.f32 %v766, %v770
    %v775 = vsub.f32 %v767, %v773
    %v776 = vmul.f32 %v774, 1.442695
    %v777 = vpow.pop %v776
    %v778 = vmul.f32 %v775, 1.442695
    %v779 = vpow.pop %v778
    %v780 = vsel %vm236, %v777, 0.0
    %781 = vadd.xlane.f32.xlu0 %v780
    %v782 = vpop.xlane.xlu0 %781
    %v783 = vsel %vm236, %v779, 0.0
    %784 = vadd.xlane.f32.xlu0 %v783
    %v785 = vpop.xlane.xlu0 %784
    %v786 = vrcp.pop %v782
    %v787 = vrcp.pop %v785
    %v788 = vmul.f32 %v777, %v786
    %v789 = vmul.f32 %v779, %v787
    %790 = vrot.lane.b32.xlu0 %v722, 64
    %v791 = vpop.permute.xlu0 %790
    %792 = vrot.lane.b32.xlu0 %v725, 64
    %v793 = vpop.permute.xlu0 %792
    %v797 = vsel %vm236, %v788, 0
    %v800 = vsel %vm236, %v789, 0
    %802 = vmatpush.msra.mxu0 0.0
    %803 = vmatpush.msra.mxu0 0.0
    %804 = vmatpush.msra.mxu0 0.0
    %805 = vmatpush.msra.mxu0 0.0
    %806 = vmatpush.msra.mxu0 0.0
    %807 = vmatpush.msra.mxu0 0.0
    %808 = vmatpush.msra.mxu0 0.0
    %809 = vmatpush.msra.mxu0 0.0
    %810 = vmatpush.msra.mxu0 0.0
    %811 = vmatpush.msra.mxu0 0.0
    %812 = vmatpush.msra.mxu0 0.0
    %813 = vmatpush.msra.mxu0 0.0
    %814 = vmatpush.msra.mxu0 0.0
    %815 = vmatpush.msra.mxu0 0.0
    %816 = vmatpush.msra.mxu0 %v793
    %817 = vmatpush.msra.mxu0 %v791
    %818 = vmatmul.f32.gmra.mxu0 %v797
    %v819 = vpop.f32.mrf.mxu0
    %v820 = vadd.f32 0.0, %v819
    %821 = vmatmul.f32.gmra.mxu0 %v800
    %v822 = vpop.f32.mrf.mxu0
    %v823 = vadd.f32 0.0, %v822
    %824 = vdwg.mxu0
    %825 = vrot.lane.b32.xlu0 %v722, 112
    %v826 = vpop.permute.xlu0 %825
    %827 = vrot.lane.b32.xlu0 %v725, 112
    %v828 = vpop.permute.xlu0 %827
    %829 = vrot.lane.b32.xlu0 %v722, 80
    %v830 = vpop.permute.xlu0 %829
    %831 = vrot.lane.b32.xlu0 %v725, 80
    %v832 = vpop.permute.xlu0 %831
    %v833 = vsel %vm236, %v826, 0
    %v835 = vsel %vm236, %v828, 0
    %v837 = vsel %vm236, %v830, 0
    %v839 = vsel %vm236, %v832, 0
    %841 = vmatpush.xpose.msra.mxu0 0.0
    %842 = vmatpush.xpose.msra.mxu0 0.0
    %843 = vmatpush.xpose.msra.mxu0 0.0
    %844 = vmatpush.xpose.msra.mxu0 0.0
    %845 = vmatpush.xpose.msra.mxu0 0.0
    %846 = vmatpush.xpose.msra.mxu0 0.0
    %847 = vmatpush.xpose.msra.mxu0 0.0
    %848 = vmatpush.xpose.msra.mxu0 0.0
    %849 = vmatpush.xpose.msra.mxu0 0.0
    %850 = vmatpush.xpose.msra.mxu0 0.0
    %851 = vmatpush.xpose.msra.mxu0 0.0
    %852 = vmatpush.xpose.msra.mxu0 0.0
    %853 = vmatpush.xpose.msra.mxu0 0.0
    %854 = vmatpush.xpose.msra.mxu0 0.0
    %855 = vmatpush.xpose.msra.mxu0 %v839
    %856 = vmatpush.xpose.msra.mxu0 %v837
    %857 = vmatmul.f32.gmra.mxu0 %v833
    %v858 = vpop.f32.mrf.mxu0
    %v859 = vadd.f32 0.0, %v858
    %860 = vmatmul.f32.gmra.mxu0 %v835
    %v861 = vpop.f32.mrf.mxu0
    %v862 = vadd.f32 0.0, %v861
    %863 = vdwg.mxu0
    %v864 = vmul.f32 %v859, 0.25
    %v865 = vmul.f32 %v862, 0.25
    %v866 = vadd.f32 %v864, %v189
    %v867 = vadd.f32 %v865, %v190
    %v868 = vsel %vm236, %v866, -inf
    %869 = vmax.xlane.f32.xlu0 %v868
    %v870 = vpop.xlane.xlu0 %869
    %v871 = vsel %vm236, %v867, -inf
    %872 = vmax.xlane.f32.xlu0 %v871
    %v873 = vpop.xlane.xlu0 %872
    %v874 = vsub.f32 %v866, %v870
    %v875 = vsub.f32 %v867, %v873
    %v876 = vmul.f32 %v874, 1.442695
    %v877 = vpow.pop %v876
    %v878 = vmul.f32 %v875, 1.442695
    %v879 = vpow.pop %v878
    %v880 = vsel %vm236, %v877, 0.0
    %881 = vadd.xlane.f32.xlu0 %v880
    %v882 = vpop.xlane.xlu0 %881
    %v883 = vsel %vm236, %v879, 0.0
    %884 = vadd.xlane.f32.xlu0 %v883
    %v885 = vpop.xlane.xlu0 %884
    %v886 = vrcp.pop %v882
    %v887 = vrcp.pop %v885
    %v888 = vmul.f32 %v877, %v886
    %v889 = vmul.f32 %v879, %v887
    %890 = vrot.lane.b32.xlu0 %v722, 48
    %v891 = vpop.permute.xlu0 %890
    %892 = vrot.lane.b32.xlu0 %v725, 48
    %v893 = vpop.permute.xlu0 %892
    %v897 = vsel %vm236, %v888, 0
    %v900 = vsel %vm236, %v889, 0
    %902 = vmatpush.msra.mxu0 0.0
    %903 = vmatpush.msra.mxu0 0.0
    %904 = vmatpush.msra.mxu0 0.0
    %905 = vmatpush.msra.mxu0 0.0
    %906 = vmatpush.msra.mxu0 0.0
    %907 = vmatpush.msra.mxu0 0.0
    %908 = vmatpush.msra.mxu0 0.0
    %909 = vmatpush.msra.mxu0 0.0
    %910 = vmatpush.msra.mxu0 0.0
    %911 = vmatpush.msra.mxu0 0.0
    %912 = vmatpush.msra.mxu0 0.0
    %913 = vmatpush.msra.mxu0 0.0
    %914 = vmatpush.msra.mxu0 0.0
    %915 = vmatpush.msra.mxu0 0.0
    %916 = vmatpush.msra.mxu0 %v893
    %917 = vmatpush.msra.mxu0 %v891
    %918 = vmatmul.f32.gmra.mxu0 %v897
    %v919 = vpop.f32.mrf.mxu0
    %v920 = vadd.f32 0.0, %v919
    %921 = vmatmul.f32.gmra.mxu0 %v900
    %v922 = vpop.f32.mrf.mxu0
    %v923 = vadd.f32 0.0, %v922
    %924 = vdwg.mxu0
    %v926 = vsel %vm236, %v920, 0
    %v929 = vsel %vm236, %v923, 0
    %931 = vmatpush.msra.mxu0 0.0
    %932 = vmatpush.msra.mxu0 0.0
    %933 = vmatpush.msra.mxu0 0.0
    %934 = vmatpush.msra.mxu0 0.0
    %935 = vmatpush.msra.mxu0 0.0
    %936 = vmatpush.msra.mxu0 0.0
    %937 = vmatpush.msra.mxu0 0.0
    %938 = vmatpush.msra.mxu0 0.0
    %939 = vmatpush.msra.mxu0 0.0
    %940 = vmatpush.msra.mxu0 0.0
    %941 = vmatpush.msra.mxu0 0.0
    %942 = vmatpush.msra.mxu0 0.0
    %943 = vmatpush.msra.mxu0 0.0
    %944 = vmatpush.msra.mxu0 0.0
    %945 = vmatpush.msra.mxu0 %v694
    %946 = vmatpush.msra.mxu0 %v693
    %947 = vmatmul.f32.gmra.mxu0 %v926
    %v948 = vpop.f32.mrf.mxu0
    %v949 = vadd.f32 0.0, %v948
    %950 = vmatmul.f32.gmra.mxu0 %v929
    %v951 = vpop.f32.mrf.mxu0
    %v952 = vadd.f32 0.0, %v951
    %953 = vdwg.mxu0
    %v955 = vsel %vm236, %v820, 0
    %v958 = vsel %vm236, %v823, 0
    %960 = vmatpush.msra.mxu0 0.0
    %961 = vmatpush.msra.mxu0 0.0
    %962 = vmatpush.msra.mxu0 0.0
    %963 = vmatpush.msra.mxu0 0.0
    %964 = vmatpush.msra.mxu0 0.0
    %965 = vmatpush.msra.mxu0 0.0
    %966 = vmatpush.msra.mxu0 0.0
    %967 = vmatpush.msra.mxu0 0.0
    %968 = vmatpush.msra.mxu0 0.0
    %969 = vmatpush.msra.mxu0 0.0
    %970 = vmatpush.msra.mxu0 0.0
    %971 = vmatpush.msra.mxu0 0.0
    %972 = vmatpush.msra.mxu0 0.0
    %973 = vmatpush.msra.mxu0 0.0
    %974 = vmatpush.msra.mxu0 %v692
    %975 = vmatpush.msra.mxu0 %v691
    %976 = vmatmul.f32.gmra.mxu0 %v955
    %v977 = vpop.f32.mrf.mxu0
    %v978 = vadd.f32 %v949, %v977
    %979 = vmatmul.f32.gmra.mxu0 %v958
    %v980 = vpop.f32.mrf.mxu0
    %v981 = vadd.f32 %v952, %v980
    %982 = vdwg.mxu0
    %v983 = vperm.slane %v696, 1
    %v984 = vadd.f32 %v978, %v983
    %v985 = vadd.f32 %v981, %v983
    %v986 = vadd.f32 %v984, %v683
    %v987 = vadd.f32 %v985, %v684
    %v988 = vsel %vm131, %v986, 0.0
    %989 = vadd.xlane.f32.xlu0 %v988
    %v990 = vpop.xlane.xlu0 %989
    %v991 = vsel %vm131, %v987, 0.0
    %992 = vadd.xlane.f32.xlu0 %v991
    %v993 = vpop.xlane.xlu0 %992
    %v994 = vmul.f32 %v990, %v144
    %v995 = vmul.f32 %v993, %v144
    %v996 = vsub.f32 %v986, %v994
    %v997 = vsub.f32 %v987, %v995
    %v998 = vmul.f32 %v996, %v996
    %v999 = vmul.f32 %v997, %v997
    %v1000 = vsel %vm131, %v998, 0.0
    %1001 = vadd.xlane.f32.xlu0 %v1000
    %v1002 = vpop.xlane.xlu0 %1001
    %v1003 = vsel %vm131, %v999, 0.0
    %1004 = vadd.xlane.f32.xlu0 %v1003
    %v1005 = vpop.xlane.xlu0 %1004
    %v1006 = vmul.f32 %v1002, %v144
    %v1007 = vmul.f32 %v1005, %v144
    %v1008 = vadd.f32 %v1006, 1e-12
    %v1009 = vadd.f32 %v1007, 1e-12
    %v1010 = vrsqrt.pop %v1008
    %v1011 = vmul.f32 %v1010, %v1008
    %v1012 = vmul.f32 %v1011, %v1010
    %v1013 = vmul.f32 0.5, %v1012
    %v1014 = vsub.f32 1.5, %v1013
    %v1015 = vmul.f32 %v1010, %v1014
    %vm1016 = vweird.f32 %v1008
    %vm1017 = vweird.f32 %v1010
    %vm1018 = vmor %vm1016, %vm1017
    %v1019 = vsel %vm1018, %v1010, %v1015
    %v1020 = vrsqrt.pop %v1009
    %v1021 = vmul.f32 %v1020, %v1009
    %v1022 = vmul.f32 %v1021, %v1020
    %v1023 = vmul.f32 0.5, %v1022
    %v1024 = vsub.f32 1.5, %v1023
    %v1025 = vmul.f32 %v1020, %v1024
    %vm1026 = vweird.f32 %v1009
    %vm1027 = vweird.f32 %v1020
    %vm1028 = vmor %vm1026, %vm1027
    %v1029 = vsel %vm1028, %v1020, %v1025
    %v1030 = vmul.f32 %v996, %v1019
    %v1031 = vmul.f32 %v997, %v1029
    %v1032 = vperm.slane %v696, 2
    %v1033 = vmul.f32 %v1030, %v1032
    %v1034 = vmul.f32 %v1031, %v1032
    %v1035 = vperm.slane %v696, 3
    %v1036 = vadd.f32 %v1033, %v1035
    %v1037 = vadd.f32 %v1034, %v1035
    %s1038 = scalar_lea.vmem %s5, 32
    %v1039 = vld [vmem:[%s1038] sm:$0xff]
    %v1040 = vld [vmem:[%s1038 + $0x8] sm:$0xff]
    %v1041 = vld [vmem:[%s1038 + $0x10] sm:$0xff]
    %v1042 = vld [vmem:[%s1038 + $0x18] sm:$0xff]
    %v1043 = vperm.slane %v696, 4
    %v1045 = vsel %vm131, %v1036, 0
    %v1048 = vsel %vm131, %v1037, 0
    %1050 = vmatpush.msra.mxu0 0.0
    %1051 = vmatpush.msra.mxu0 0.0
    %1052 = vmatpush.msra.mxu0 0.0
    %1053 = vmatpush.msra.mxu0 0.0
    %1054 = vmatpush.msra.mxu0 0.0
    %1055 = vmatpush.msra.mxu0 0.0
    %1056 = vmatpush.msra.mxu0 0.0
    %1057 = vmatpush.msra.mxu0 0.0
    %1058 = vmatpush.msra.mxu0 0.0
    %1059 = vmatpush.msra.mxu0 0.0
    %1060 = vmatpush.msra.mxu0 0.0
    %1061 = vmatpush.msra.mxu0 0.0
    %1062 = vmatpush.msra.mxu0 %v1042
    %1063 = vmatpush.msra.mxu0 %v1041
    %1064 = vmatpush.msra.mxu0 %v1040
    %1065 = vmatpush.msra.mxu0 %v1039
    %1066 = vmatmul.f32.gmra.mxu0 %v1045
    %v1067 = vpop.f32.mrf.mxu0
    %v1068 = vadd.f32 %v1043, %v1067
    %1069 = vmatmul.f32.gmra.mxu0 %v1048
    %v1070 = vpop.f32.mrf.mxu0
    %v1071 = vadd.f32 %v1043, %v1070
    %1072 = vdwg.mxu0
    %v1073 = vmul.f32 %v1068, %v1068
    %v1074 = vmul.f32 %v1071, %v1071
    %v1075 = vmul.f32 %v1068, %v1073
    %v1076 = vmul.f32 %v1071, %v1074
    %v1077 = vmul.f32 %v1075, 0.044715
    %v1078 = vmul.f32 %v1076, 0.044715
    %v1079 = vadd.f32 %v1068, %v1077
    %v1080 = vadd.f32 %v1071, %v1078
    %v1081 = vmul.f32 %v1079, 0.7978846
    %v1082 = vmul.f32 %v1080, 0.7978846
    %v1083 = vtanh.pop %v1081
    %v1084 = vtanh.pop %v1082
    %v1085 = vadd.f32 %v1083, 1.0
    %v1086 = vadd.f32 %v1084, 1.0
    %v1087 = vmul.f32 %v1085, 0.5
    %v1088 = vmul.f32 %v1086, 0.5
    %v1089 = vmul.f32 %v1068, %v1087
    %v1090 = vmul.f32 %v1071, %v1088
    %s1091 = scalar_lea.vmem %s6, 64
    %v1092 = vld [vmem:[%s1091] sm:$0xff]
    %v1093 = vld [vmem:[%s1091 + $0x8] sm:$0xff]
    %v1094 = vld [vmem:[%s1091 + $0x10] sm:$0xff]
    %v1095 = vld [vmem:[%s1091 + $0x18] sm:$0xff]
    %v1096 = vld [vmem:[%s1091 + $0x20] sm:$0xff]
    %v1097 = vld [vmem:[%s1091 + $0x28] sm:$0xff]
    %v1098 = vld [vmem:[%s1091 + $0x30] sm:$0xff]
    %v1099 = vld [vmem:[%s1091 + $0x38] sm:$0xff]
    %v1100 = vperm.slane %v696, 5
    %v1102 = vsel %vm603, %v1089, 0
    %v1105 = vsel %vm603, %v1090, 0
    %1107 = vmatpush.msra.mxu0 0.0
    %1108 = vmatpush.msra.mxu0 0.0
    %1109 = vmatpush.msra.mxu0 0.0
    %1110 = vmatpush.msra.mxu0 0.0
    %1111 = vmatpush.msra.mxu0 0.0
    %1112 = vmatpush.msra.mxu0 0.0
    %1113 = vmatpush.msra.mxu0 0.0
    %1114 = vmatpush.msra.mxu0 0.0
    %1115 = vmatpush.msra.mxu0 %v1099
    %1116 = vmatpush.msra.mxu0 %v1098
    %1117 = vmatpush.msra.mxu0 %v1097
    %1118 = vmatpush.msra.mxu0 %v1096
    %1119 = vmatpush.msra.mxu0 %v1095
    %1120 = vmatpush.msra.mxu0 %v1094
    %1121 = vmatpush.msra.mxu0 %v1093
    %1122 = vmatpush.msra.mxu0 %v1092
    %1123 = vmatmul.f32.gmra.mxu0 %v1102
    %v1124 = vpop.f32.mrf.mxu0
    %v1125 = vadd.f32 %v1100, %v1124
    %1126 = vmatmul.f32.gmra.mxu0 %v1105
    %v1127 = vpop.f32.mrf.mxu0
    %v1128 = vadd.f32 %v1100, %v1127
    %1129 = vdwg.mxu0
    %v1130 = vadd.f32 %v1125, %v1036
    %v1131 = vadd.f32 %v1128, %v1037
    %v1132 = vsel %vm131, %v1130, 0.0
    %1133 = vadd.xlane.f32.xlu0 %v1132
    %v1134 = vpop.xlane.xlu0 %1133
    %v1135 = vsel %vm131, %v1131, 0.0
    %1136 = vadd.xlane.f32.xlu0 %v1135
    %v1137 = vpop.xlane.xlu0 %1136
    %v1138 = vmul.f32 %v1134, %v144
    %v1139 = vmul.f32 %v1137, %v144
    %v1140 = vsub.f32 %v1130, %v1138
    %v1141 = vsub.f32 %v1131, %v1139
    %v1142 = vmul.f32 %v1140, %v1140
    %v1143 = vmul.f32 %v1141, %v1141
    %v1144 = vsel %vm131, %v1142, 0.0
    %1145 = vadd.xlane.f32.xlu0 %v1144
    %v1146 = vpop.xlane.xlu0 %1145
    %v1147 = vsel %vm131, %v1143, 0.0
    %1148 = vadd.xlane.f32.xlu0 %v1147
    %v1149 = vpop.xlane.xlu0 %1148
    %v1150 = vmul.f32 %v1146, %v144
    %v1151 = vmul.f32 %v1149, %v144
    %v1152 = vadd.f32 %v1150, 1e-12
    %v1153 = vadd.f32 %v1151, 1e-12
    %v1154 = vrsqrt.pop %v1152
    %v1155 = vmul.f32 %v1154, %v1152
    %v1156 = vmul.f32 %v1155, %v1154
    %v1157 = vmul.f32 0.5, %v1156
    %v1158 = vsub.f32 1.5, %v1157
    %v1159 = vmul.f32 %v1154, %v1158
    %vm1160 = vweird.f32 %v1152
    %vm1161 = vweird.f32 %v1154
    %vm1162 = vmor %vm1160, %vm1161
    %v1163 = vsel %vm1162, %v1154, %v1159
    %v1164 = vrsqrt.pop %v1153
    %v1165 = vmul.f32 %v1164, %v1153
    %v1166 = vmul.f32 %v1165, %v1164
    %v1167 = vmul.f32 0.5, %v1166
    %v1168 = vsub.f32 1.5, %v1167
    %v1169 = vmul.f32 %v1164, %v1168
    %vm1170 = vweird.f32 %v1153
    %vm1171 = vweird.f32 %v1164
    %vm1172 = vmor %vm1170, %vm1171
    %v1173 = vsel %vm1172, %v1164, %v1169
    %v1174 = vmul.f32 %v1140, %v1163
    %v1175 = vmul.f32 %v1141, %v1173
    %v1176 = vperm.slane %v696, 6
    %v1177 = vmul.f32 %v1174, %v1176
    %v1178 = vmul.f32 %v1175, %v1176
    %v1179 = vperm.slane %v696, 7
    %v1180 = vadd.f32 %v1177, %v1179
    %v1181 = vadd.f32 %v1178, %v1179
    %v1182 = vlaneseq
    %v1183 = vshrl.u32 %v1182, 7
    %v1184 = vlaneseq
    %v1185 = vand.u32 %v1184, 127
    %v1186 = vmul.u32 %v1183, 8
    %vm1187 = vcmp.eq.s32.totalorder %v1185, %v1186
    %v1188 = vsel %vm1187, 1, 0
    %v1189 = vcvt.s32.f32 %v1188
    %v1191 = vsel %vm236, %v1189, 0
    %1193 = vmatpush.msra.mxu0 0.0
    %1194 = vmatpush.msra.mxu0 0.0
    %1195 = vmatpush.msra.mxu0 0.0
    %1196 = vmatpush.msra.mxu0 0.0
    %1197 = vmatpush.msra.mxu0 0.0
    %1198 = vmatpush.msra.mxu0 0.0
    %1199 = vmatpush.msra.mxu0 0.0
    %1200 = vmatpush.msra.mxu0 0.0
    %1201 = vmatpush.msra.mxu0 0.0
    %1202 = vmatpush.msra.mxu0 0.0
    %1203 = vmatpush.msra.mxu0 0.0
    %1204 = vmatpush.msra.mxu0 0.0
    %1205 = vmatpush.msra.mxu0 0.0
    %1206 = vmatpush.msra.mxu0 0.0
    %1207 = vmatpush.msra.mxu0 %v1181
    %1208 = vmatpush.msra.mxu0 %v1180
    %1209 = vmatmul.f32.gmra.mxu0 %v1191
    %v1210 = vpop.f32.mrf.mxu0
    %v1211 = vadd.f32 0.0, %v1210
    %1212 = vdwg.mxu0
    %v1213 = vld [vmem:[#allocation10] sm:$0xff]
    %v1214 = vld [vmem:[#allocation10 + $0x8] sm:$0xff]
    %v1215 = vld [vmem:[#allocation10 + $0x10] sm:$0xff]
    %v1216 = vld [vmem:[#allocation10 + $0x18] sm:$0xff]
    %v1217 = vperm.slane %v128, 2
    %v1219 = vsel %vm131, %v1211, 0
    %1221 = vmatpush.msra.mxu0 0.0
    %1222 = vmatpush.msra.mxu0 0.0
    %1223 = vmatpush.msra.mxu0 0.0
    %1224 = vmatpush.msra.mxu0 0.0
    %1225 = vmatpush.msra.mxu0 0.0
    %1226 = vmatpush.msra.mxu0 0.0
    %1227 = vmatpush.msra.mxu0 0.0
    %1228 = vmatpush.msra.mxu0 0.0
    %1229 = vmatpush.msra.mxu0 0.0
    %1230 = vmatpush.msra.mxu0 0.0
    %1231 = vmatpush.msra.mxu0 0.0
    %1232 = vmatpush.msra.mxu0 0.0
    %1233 = vmatpush.msra.mxu0 %v1216
    %1234 = vmatpush.msra.mxu0 %v1215
    %1235 = vmatpush.msra.mxu0 %v1214
    %1236 = vmatpush.msra.mxu0 %v1213
    %1237 = vmatmul.f32.gmra.mxu0 %v1219
    %v1238 = vpop.f32.mrf.mxu0
    %v1239 = vadd.f32 %v1217, %v1238
    %1240 = vdwg.mxu0
    %v1241 = vtanh.pop %v1239
    %v1242 = vld [vmem:[#allocation11] sm:$0xff]
    %v1243 = vld [vmem:[#allocation11 + $0x8] sm:$0xff]
    %v1244 = vld [vmem:[#allocation11 + $0x10] sm:$0xff]
    %v1245 = vld [vmem:[#allocation11 + $0x18] sm:$0xff]
    %v1246 = vperm.slane %v128, 3
    %v1248 = vsel %vm131, %v1241, 0
    %1250 = vmatpush.msra.mxu0 0.0
    %1251 = vmatpush.msra.mxu0 0.0
    %1252 = vmatpush.msra.mxu0 0.0
    %1253 = vmatpush.msra.mxu0 0.0
    %1254 = vmatpush.msra.mxu0 0.0
    %1255 = vmatpush.msra.mxu0 0.0
    %1256 = vmatpush.msra.mxu0 0.0
    %1257 = vmatpush.msra.mxu0 0.0
    %1258 = vmatpush.msra.mxu0 0.0
    %1259 = vmatpush.msra.mxu0 0.0
    %1260 = vmatpush.msra.mxu0 0.0
    %1261 = vmatpush.msra.mxu0 0.0
    %1262 = vmatpush.msra.mxu0 %v1245
    %1263 = vmatpush.msra.mxu0 %v1244
    %1264 = vmatpush.msra.mxu0 %v1243
    %1265 = vmatpush.msra.mxu0 %v1242
    %1266 = vmatmul.f32.gmra.mxu0 %v1248
    %v1267 = vpop.f32.mrf.mxu0
    %v1268 = vadd.f32 %v1246, %v1267
    %1269 = vdwg.mxu0
    %vm1270 = vcmask 1041408
    %v1271 = vsel %vm1270, %v1268, -inf
    %1272 = vmax.xlane.f32.xlu0 %v1271
    %v1273 = vpop.xlane.xlu0 %1272
    %v1274 = vsub.f32 %v1268, %v1273
    %v1275 = vmul.f32 %v1274, 1.442695
    %v1276 = vpow.pop %v1275
    %v1277 = vsel %vm1270, %v1276, 0.0
    %1278 = vadd.xlane.f32.xlu0 %v1277
    %v1279 = vpop.xlane.xlu0 %1278
    %v1280 = vrcp.pop %v1279
    %v1281 = vmul.f32 %v1279, %v1280
    %v1282 = vsub.f32 1.0, %v1281
    %v1283 = vmul.f32 %v1280, %v1282
    %v1284 = vadd.f32 %v1280, %v1283
    %vm1285 = vweird.f32 %v1279
    %vm1286 = vweird.f32 %v1280
    %vm1287 = vmor %vm1285, %vm1286
    %v1288 = vsel %vm1287, %v1280, %v1284
    %v1289 = vand.u32 2147483647, %v1279
    %vm1290 = vcmp.eq.f32.partialorder %v1289, 8.507059e+37
    %v1291 = vand.u32 %v1279, 2147483648
    %v1292 = vor.u32 1.1754944e-38, %v1291
    %v1293 = vsel %vm1290, %v1292, %v1288
    %v1294 = vmul.f32 %v1276, %v1293
    %1295 = vst [vmem:[#allocation13] sm:$0x3] %v1294
    // Predicated region
    $region66: #{tpu_custom_call.1} parent=1 // pred_check
      _
    $region67: #{tpu_custom_call.1} parent=1 // pred_check_branch
      %1297 = sbr.rel (0) target = $region69
    $region68: #{tpu_custom_call.1} parent=1 // pred_region
      %1299 = vsyncadd [#allocation4], 0
      %s1301 = sshll.u32 [#allocation13], 4
      %s1302 = int_to_ptr.vmem [resolvable:$true] %s1301
      %s1303 = sshll.u32 %s10, 4
      %s1304 = int_to_ptr.hbm [resolvable:$true] %s1303
      %1306 = dma.vmem_to_hbm [thread:$0]  %s1302, 32, %s1304, [#allocation4]
    $region69: #{tpu_custom_call.1} parent=1 // pred_fallthru
      _
    // Predicated region
    $region70: #{tpu_custom_call.1} parent=1 // pred_check
      _
    $region71: #{tpu_custom_call.1} parent=1 // pred_check_branch
      %1308 = sbr.rel (0) target = $region73
    $region72: #{tpu_custom_call.1} parent=1 // pred_region
      %1310 = dma.done [#allocation4], 32
    $region73: #{tpu_custom_call.1} parent=1 // pred_fallthru
      _
    %1311 = vsyncpa [#allocation3], 1
    %1312 = vsyncpa [#allocation6], 1
    %1313 = vsyncpa [#allocation9], 1
    %1314 = vsyncpa [#allocation12], 1
    %1315 = vsyncpa [#allocation4], 1

</llo_original>
